<compile_context>
chip_gen: v6e
topology: v6e:2x2x1
jax: 0.10.0
libtpu: 0.0.40
codegen_flags: <defaults>
</compile_context>

<pallas_src>
import functools

import jax
import jax.numpy as jnp
from jax import lax
from jax.experimental import pallas as pl
from jax.experimental.pallas import tpu as pltpu


def _log_softmax(x):
    x = x - jnp.max(x, axis=-1, keepdims=True)
    return x - jnp.log(jnp.sum(jnp.exp(x), axis=-1, keepdims=True))


def _smart_loss_kernel(mean_embed_ref, delta_init_ref, p_t_ref, lp_t_ref,
                       wp_ref, bp_ref, wc_ref, bc_ref,
                       loss_ref, delta_ref,
                       *, alpha, epsilon, n_updates):
    B, S, D = delta_ref.shape
    inv_s = 1.0 / float(S)
    inv_b = 1.0 / float(B)

    # Loop-invariant loads, hoisted once (weights + target stats stay resident).
    mean_embed = mean_embed_ref[...].astype(jnp.float32)   # (B, D)
    p_t = p_t_ref[...].astype(jnp.float32)                 # (B, C)  softmax(state)
    lp_t = lp_t_ref[...].astype(jnp.float32)               # (B, C)  log_softmax(state)
    wp = wp_ref[...].astype(jnp.float32)                   # (D, H)
    bp = bp_ref[...].astype(jnp.float32)                   # (1, H)
    wc = wc_ref[...].astype(jnp.float32)                   # (H, C)
    bc = bc_ref[...].astype(jnp.float32)                   # (1, C)

    # delta ~ randn_like(embed) * init_noise (drawn in the wrapper); kept in
    # VMEM scratch for the whole adversarial loop.
    delta_ref[...] = delta_init_ref[...].astype(jnp.float32)

    def eval_fn(delta_mean):
        # Surrogate eval_fn(embed + delta): mean-pool -> tanh dense -> classifier.
        mean = mean_embed + delta_mean                                         # (B, D)
        pooled = jnp.tanh(jnp.dot(mean, wp, preferred_element_type=jnp.float32) + bp)
        logits = jnp.dot(pooled, wc, preferred_element_type=jnp.float32) + bc  # (B, C)
        lp_in = _log_softmax(logits)
        return pooled, lp_in, jnp.exp(lp_in)

    def update_body(_, carry):
        delta = delta_ref[...]                                                 # (B, S, D)
        pooled, lp_in, p_in = eval_fn(jnp.mean(delta, axis=1))
        # d/d logits of [KL(p_t || softmax(logits)) / B]; the reverse-KL term of
        # the Jeffrey divergence uses detached adversarial logits => zero grad.
        g_logits = (p_in - p_t) * inv_b                                        # (B, C)
        # Backward matmuls contract wc / wp directly (no transposed copies).
        g_pooled = lax.dot_general(g_logits, wc, (((1,), (1,)), ((), ())),
                                   preferred_element_type=jnp.float32)          # (B, H)
        g_pre = g_pooled * (1.0 - pooled * pooled)                               # tanh'
        g_mean = lax.dot_general(g_pre, wp, (((1,), (1,)), ((), ())),
                                 preferred_element_type=jnp.float32)             # (B, D)
        # delta <- (delta + alpha * dL/ddelta) / (||.||_inf(-1, keepdim) + eps);
        # dL/ddelta = g_mean / S broadcast over the sequence axis, fused into the add.
        nd = delta + (alpha * inv_s) * g_mean[:, None, :]                        # (B, S, D)
        nrm = jnp.max(jnp.abs(nd), axis=-1, keepdims=True)                       # (B, S, 1)
        delta_ref[...] = nd / (nrm + epsilon)
        return carry

    lax.fori_loop(0, n_updates, update_body, 0, unroll=True)

    # Final iteration: loss only (the PyTorch module returns before computing
    # any gradient / delta update on the last pass).
    _, lp_in, p_in = eval_fn(jnp.mean(delta_ref[...], axis=1))
    jeff = jnp.sum(p_t * (lp_t - lp_in) + p_in * (lp_in - lp_t),
                   axis=(0, 1), keepdims=True) * inv_b                           # (1, 1)
    loss_ref[...] = jeff


def smart_loss(embed, state, params, *, inner_loop=2, alpha=1e-3,
               epsilon=1e-6, init_noise=1e-5, key=None, vmem_limit_bytes=None):
    """Pallas implementation of SMARTLoss.forward(embed, state)."""
    wp, bp, wc, bc = params
    B, S, D = embed.shape

    # Loop-invariant preprocessing done once in plain JAX (tiny arrays):
    mean_embed = jnp.mean(embed.astype(jnp.float32), axis=1)        # (B, D)
    lp_t = jax.nn.log_softmax(state.astype(jnp.float32), axis=-1)   # (B, C)
    p_t = jnp.exp(lp_t)                                             # (B, C)
    delta_init = jax.random.normal(key, embed.shape, dtype=jnp.float32) * init_noise

    vmem = pl.BlockSpec(memory_space=pltpu.MemorySpace.VMEM)
    compiler_params = (pltpu.CompilerParams(vmem_limit_bytes=vmem_limit_bytes)
                       if vmem_limit_bytes is not None else None)

    loss = pl.pallas_call(
        functools.partial(_smart_loss_kernel, alpha=alpha, epsilon=epsilon,
                          n_updates=inner_loop + 1),
        out_shape=jax.ShapeDtypeStruct((1, 1), jnp.float32),
        in_specs=[vmem] * 8,
        out_specs=vmem,
        scratch_shapes=[pltpu.VMEM((B, S, D), jnp.float32)],
        compiler_params=compiler_params,
    )(mean_embed, delta_init, p_t, lp_t, wp, bp, wc, bc)
    return loss[0, 0]


if __name__ == "__main__":
    # Small but lane-dense shapes: batch=2, seq=8, hidden=128, pooler=128, classes=8.
    B, S, D, H, C = 2, 8, 128, 128, 8
    key = jax.random.PRNGKey(0)
    k_e, k_wp, k_wc, k_d = jax.random.split(key, 4)

    embed = jax.random.normal(k_e, (B, S, D), dtype=jnp.float32)

    # Deterministic surrogate model parameters (pooler + classifier).
    wp = jax.random.normal(k_wp, (D, H), dtype=jnp.float32) * 0.05
    bp = jnp.zeros((1, H), dtype=jnp.float32)
    wc = jax.random.normal(k_wc, (H, C), dtype=jnp.float32) * 0.05
    bc = jnp.zeros((1, C), dtype=jnp.float32)

    # "state": clean logits of the surrogate model (plain-JAX glue).
    pooled_clean = jnp.tanh(jnp.mean(embed, axis=1) @ wp + bp)
    state = pooled_clean @ wc + bc                                   # (B, C)

    loss = smart_loss(embed, state, (wp, bp, wc, bc),
                      inner_loop=2, alpha=1e-3, epsilon=1e-6,
                      init_noise=1e-5, key=k_d)
    loss = jax.block_until_ready(loss)
    assert loss.shape == () and bool(jnp.isfinite(loss))
    print("KERNEL_OK")
</pallas_src>

<mosaic_0001>
module attributes {stable_mosaic.version = 11 : i64} {
  func.func @_smart_loss_kernel(%arg0: memref<2x128xf32, #tpu.memory_space<vmem>>, %arg1: memref<2x8x128xf32, #tpu.memory_space<vmem>>, %arg2: memref<2x8xf32, #tpu.memory_space<vmem>>, %arg3: memref<2x8xf32, #tpu.memory_space<vmem>>, %arg4: memref<128x128xf32, #tpu.memory_space<vmem>>, %arg5: memref<1x128xf32, #tpu.memory_space<vmem>>, %arg6: memref<128x8xf32, #tpu.memory_space<vmem>>, %arg7: memref<1x8xf32, #tpu.memory_space<vmem>>, %arg8: memref<1x1xf32, #tpu.memory_space<vmem>>, %arg9: memref<2x8x128xf32, #tpu.memory_space<vmem>>) attributes {dimension_semantics = [], scalar_prefetch = 0 : i64, scratch_operands = 1 : i64, tpu.core_type = #tpu.core_type<tc>} {
    %c0 = arith.constant 0 : index
    %c0_0 = arith.constant 0 : index
    %0 = vector.load %arg0[%c0, %c0_0] : memref<2x128xf32, #tpu.memory_space<vmem>>, vector<2x128xf32>
    %c0_1 = arith.constant 0 : index
    %c0_2 = arith.constant 0 : index
    %1 = vector.load %arg2[%c0_1, %c0_2] : memref<2x8xf32, #tpu.memory_space<vmem>>, vector<2x8xf32>
    %c0_3 = arith.constant 0 : index
    %c0_4 = arith.constant 0 : index
    %2 = vector.load %arg3[%c0_3, %c0_4] : memref<2x8xf32, #tpu.memory_space<vmem>>, vector<2x8xf32>
    %c0_5 = arith.constant 0 : index
    %c0_6 = arith.constant 0 : index
    %3 = vector.load %arg4[%c0_5, %c0_6] : memref<128x128xf32, #tpu.memory_space<vmem>>, vector<128x128xf32>
    %c0_7 = arith.constant 0 : index
    %c0_8 = arith.constant 0 : index
    %4 = vector.load %arg5[%c0_7, %c0_8] : memref<1x128xf32, #tpu.memory_space<vmem>>, vector<1x128xf32>
    %c0_9 = arith.constant 0 : index
    %c0_10 = arith.constant 0 : index
    %5 = vector.load %arg6[%c0_9, %c0_10] : memref<128x8xf32, #tpu.memory_space<vmem>>, vector<128x8xf32>
    %c0_11 = arith.constant 0 : index
    %c0_12 = arith.constant 0 : index
    %6 = vector.load %arg7[%c0_11, %c0_12] : memref<1x8xf32, #tpu.memory_space<vmem>>, vector<1x8xf32>
    %c0_13 = arith.constant 0 : index
    %c0_14 = arith.constant 0 : index
    %c0_15 = arith.constant 0 : index
    %7 = vector.load %arg1[%c0_13, %c0_14, %c0_15] : memref<2x8x128xf32, #tpu.memory_space<vmem>>, vector<2x8x128xf32>
    %c0_16 = arith.constant 0 : index
    %c0_17 = arith.constant 0 : index
    %c0_18 = arith.constant 0 : index
    %8 = vector.load %arg9[%c0_16, %c0_17, %c0_18] : memref<2x8x128xf32, #tpu.memory_space<vmem>>, vector<2x8x128xf32>
    tpu.vector_store %arg9[%c0_16, %c0_17, %c0_18], %7 {strides = array<i32>} : memref<2x8x128xf32, #tpu.memory_space<vmem>>, vector<2x8x128xf32>,
    %c0_i32 = arith.constant 0 : i32
    %c0_19 = arith.constant 0 : index
    %c0_20 = arith.constant 0 : index
    %c0_21 = arith.constant 0 : index
    %9 = vector.load %arg9[%c0_19, %c0_20, %c0_21] : memref<2x8x128xf32, #tpu.memory_space<vmem>>, vector<2x8x128xf32>
    %cst = arith.constant dense<0.000000e+00> : vector<2x128xf32>
    %10 = vector.multi_reduction <add>, %9, %cst [1] : vector<2x8x128xf32> to vector<2x128xf32>
    %cst_22 = arith.constant 8.000000e+00 : f32
    %11 = vector.broadcast %cst_22 : f32 to vector<2x128xf32>
    %12 = arith.divf %10, %11 : vector<2x128xf32>
    %13 = arith.addf %0, %12 : vector<2x128xf32>
    %cst_23 = arith.constant dense<0.000000e+00> : vector<2x128xf32>
    %14 = tpu.matmul %13, %3, %cst_23 {dimension_numbers = #tpu.dot_dimension_numbers<[1], [0], [0], [1], [0, 0, 1, 1], [], []>} : vector<2x128xf32>, vector<128x128xf32>, vector<2x128xf32> -> vector<2x128xf32>
    %15 = vector.broadcast %4 : vector<1x128xf32> to vector<2x128xf32>
    %16 = arith.addf %14, %15 : vector<2x128xf32>
    %17 = math.tanh %16 : vector<2x128xf32>
    %cst_24 = arith.constant dense<0.000000e+00> : vector<2x8xf32>
    %18 = tpu.matmul %17, %5, %cst_24 {dimension_numbers = #tpu.dot_dimension_numbers<[1], [0], [0], [1], [0, 0, 1, 1], [], []>} : vector<2x128xf32>, vector<128x8xf32>, vector<2x8xf32> -> vector<2x8xf32>
    %19 = vector.broadcast %6 : vector<1x8xf32> to vector<2x8xf32>
    %20 = arith.addf %18, %19 : vector<2x8xf32>
    %cst_25 = arith.constant dense<0xFF800000> : vector<2xf32>
    %21 = vector.multi_reduction <maximumf>, %20, %cst_25 [1] : vector<2x8xf32> to vector<2xf32>
    %22 = vector.shape_cast %21 : vector<2xf32> to vector<2x1xf32>
    %23 = vector.broadcast %22 : vector<2x1xf32> to vector<2x8xf32>
    %24 = arith.subf %20, %23 : vector<2x8xf32>
    %25 = math.exp %24 : vector<2x8xf32>
    %cst_26 = arith.constant dense<0.000000e+00> : vector<2xf32>
    %26 = vector.multi_reduction <add>, %25, %cst_26 [1] : vector<2x8xf32> to vector<2xf32>
    %27 = vector.shape_cast %26 : vector<2xf32> to vector<2x1xf32>
    %28 = math.log %27 : vector<2x1xf32>
    %29 = vector.broadcast %28 : vector<2x1xf32> to vector<2x8xf32>
    %30 = arith.subf %24, %29 : vector<2x8xf32>
    %31 = math.exp %30 : vector<2x8xf32>
    %32 = arith.subf %31, %1 : vector<2x8xf32>
    %cst_27 = arith.constant 5.000000e-01 : f32
    %33 = vector.broadcast %cst_27 : f32 to vector<2x8xf32>
    %34 = arith.mulf %32, %33 : vector<2x8xf32>
    %cst_28 = arith.constant dense<0.000000e+00> : vector<2x128xf32>
    %35 = tpu.matmul %34, %5, %cst_28 {dimension_numbers = #tpu.dot_dimension_numbers<[1], [1], [0], [0], [0, 0, 1, 0], [], []>} : vector<2x8xf32>, vector<128x8xf32>, vector<2x128xf32> -> vector<2x128xf32>
    %36 = arith.mulf %17, %17 : vector<2x128xf32>
    %cst_29 = arith.constant 1.000000e+00 : f32
    %37 = vector.broadcast %cst_29 : f32 to vector<2x128xf32>
    %38 = arith.subf %37, %36 : vector<2x128xf32>
    %39 = arith.mulf %35, %38 : vector<2x128xf32>
    %cst_30 = arith.constant dense<0.000000e+00> : vector<2x128xf32>
    %40 = tpu.matmul %39, %3, %cst_30 {dimension_numbers = #tpu.dot_dimension_numbers<[1], [1], [0], [0], [0, 0, 1, 0], [], []>} : vector<2x128xf32>, vector<128x128xf32>, vector<2x128xf32> -> vector<2x128xf32>
    %41 = vector.shape_cast %40 : vector<2x128xf32> to vector<2x1x128xf32>
    %cst_31 = arith.constant 1.250000e-04 : f32
    %42 = vector.broadcast %cst_31 : f32 to vector<2x1x128xf32>
    %43 = arith.mulf %42, %41 : vector<2x1x128xf32>
    %44 = vector.broadcast %43 : vector<2x1x128xf32> to vector<2x8x128xf32>
    %45 = arith.addf %9, %44 : vector<2x8x128xf32>
    %46 = math.absf %45 : vector<2x8x128xf32>
    %cst_32 = arith.constant dense<0xFF800000> : vector<2x8xf32>
    %47 = vector.multi_reduction <maximumf>, %46, %cst_32 [2] : vector<2x8x128xf32> to vector<2x8xf32>
    %48 = vector.shape_cast %47 : vector<2x8xf32> to vector<2x8x1xf32>
    %cst_33 = arith.constant 9.99999997E-7 : f32
    %49 = vector.broadcast %cst_33 : f32 to vector<2x8x1xf32>
    %50 = arith.addf %48, %49 : vector<2x8x1xf32>
    %51 = vector.broadcast %50 : vector<2x8x1xf32> to vector<2x8x128xf32>
    %52 = arith.divf %45, %51 : vector<2x8x128xf32>
    %c0_34 = arith.constant 0 : index
    %c0_35 = arith.constant 0 : index
    %c0_36 = arith.constant 0 : index
    %53 = vector.load %arg9[%c0_34, %c0_35, %c0_36] : memref<2x8x128xf32, #tpu.memory_space<vmem>>, vector<2x8x128xf32>
    tpu.vector_store %arg9[%c0_34, %c0_35, %c0_36], %52 {strides = array<i32>} : memref<2x8x128xf32, #tpu.memory_space<vmem>>, vector<2x8x128xf32>,
    %c1_i32 = arith.constant 1 : i32
    %c0_37 = arith.constant 0 : index
    %c0_38 = arith.constant 0 : index
    %c0_39 = arith.constant 0 : index
    %54 = vector.load %arg9[%c0_37, %c0_38, %c0_39] : memref<2x8x128xf32, #tpu.memory_space<vmem>>, vector<2x8x128xf32>
    %cst_40 = arith.constant dense<0.000000e+00> : vector<2x128xf32>
    %55 = vector.multi_reduction <add>, %54, %cst_40 [1] : vector<2x8x128xf32> to vector<2x128xf32>
    %cst_41 = arith.constant 8.000000e+00 : f32
    %56 = vector.broadcast %cst_41 : f32 to vector<2x128xf32>
    %57 = arith.divf %55, %56 : vector<2x128xf32>
    %58 = arith.addf %0, %57 : vector<2x128xf32>
    %cst_42 = arith.constant dense<0.000000e+00> : vector<2x128xf32>
    %59 = tpu.matmul %58, %3, %cst_42 {dimension_numbers = #tpu.dot_dimension_numbers<[1], [0], [0], [1], [0, 0, 1, 1], [], []>} : vector<2x128xf32>, vector<128x128xf32>, vector<2x128xf32> -> vector<2x128xf32>
    %60 = vector.broadcast %4 : vector<1x128xf32> to vector<2x128xf32>
    %61 = arith.addf %59, %60 : vector<2x128xf32>
    %62 = math.tanh %61 : vector<2x128xf32>
    %cst_43 = arith.constant dense<0.000000e+00> : vector<2x8xf32>
    %63 = tpu.matmul %62, %5, %cst_43 {dimension_numbers = #tpu.dot_dimension_numbers<[1], [0], [0], [1], [0, 0, 1, 1], [], []>} : vector<2x128xf32>, vector<128x8xf32>, vector<2x8xf32> -> vector<2x8xf32>
    %64 = vector.broadcast %6 : vector<1x8xf32> to vector<2x8xf32>
    %65 = arith.addf %63, %64 : vector<2x8xf32>
    %cst_44 = arith.constant dense<0xFF800000> : vector<2xf32>
    %66 = vector.multi_reduction <maximumf>, %65, %cst_44 [1] : vector<2x8xf32> to vector<2xf32>
    %67 = vector.shape_cast %66 : vector<2xf32> to vector<2x1xf32>
    %68 = vector.broadcast %67 : vector<2x1xf32> to vector<2x8xf32>
    %69 = arith.subf %65, %68 : vector<2x8xf32>
    %70 = math.exp %69 : vector<2x8xf32>
    %cst_45 = arith.constant dense<0.000000e+00> : vector<2xf32>
    %71 = vector.multi_reduction <add>, %70, %cst_45 [1] : vector<2x8xf32> to vector<2xf32>
    %72 = vector.shape_cast %71 : vector<2xf32> to vector<2x1xf32>
    %73 = math.log %72 : vector<2x1xf32>
    %74 = vector.broadcast %73 : vector<2x1xf32> to vector<2x8xf32>
    %75 = arith.subf %69, %74 : vector<2x8xf32>
    %76 = math.exp %75 : vector<2x8xf32>
    %77 = arith.subf %76, %1 : vector<2x8xf32>
    %cst_46 = arith.constant 5.000000e-01 : f32
    %78 = vector.broadcast %cst_46 : f32 to vector<2x8xf32>
    %79 = arith.mulf %77, %78 : vector<2x8xf32>
    %cst_47 = arith.constant dense<0.000000e+00> : vector<2x128xf32>
    %80 = tpu.matmul %79, %5, %cst_47 {dimension_numbers = #tpu.dot_dimension_numbers<[1], [1], [0], [0], [0, 0, 1, 0], [], []>} : vector<2x8xf32>, vector<128x8xf32>, vector<2x128xf32> -> vector<2x128xf32>
    %81 = arith.mulf %62, %62 : vector<2x128xf32>
    %cst_48 = arith.constant 1.000000e+00 : f32
    %82 = vector.broadcast %cst_48 : f32 to vector<2x128xf32>
    %83 = arith.subf %82, %81 : vector<2x128xf32>
    %84 = arith.mulf %80, %83 : vector<2x128xf32>
    %cst_49 = arith.constant dense<0.000000e+00> : vector<2x128xf32>
    %85 = tpu.matmul %84, %3, %cst_49 {dimension_numbers = #tpu.dot_dimension_numbers<[1], [1], [0], [0], [0, 0, 1, 0], [], []>} : vector<2x128xf32>, vector<128x128xf32>, vector<2x128xf32> -> vector<2x128xf32>
    %86 = vector.shape_cast %85 : vector<2x128xf32> to vector<2x1x128xf32>
    %cst_50 = arith.constant 1.250000e-04 : f32
    %87 = vector.broadcast %cst_50 : f32 to vector<2x1x128xf32>
    %88 = arith.mulf %87, %86 : vector<2x1x128xf32>
    %89 = vector.broadcast %88 : vector<2x1x128xf32> to vector<2x8x128xf32>
    %90 = arith.addf %54, %89 : vector<2x8x128xf32>
    %91 = math.absf %90 : vector<2x8x128xf32>
    %cst_51 = arith.constant dense<0xFF800000> : vector<2x8xf32>
    %92 = vector.multi_reduction <maximumf>, %91, %cst_51 [2] : vector<2x8x128xf32> to vector<2x8xf32>
    %93 = vector.shape_cast %92 : vector<2x8xf32> to vector<2x8x1xf32>
    %cst_52 = arith.constant 9.99999997E-7 : f32
    %94 = vector.broadcast %cst_52 : f32 to vector<2x8x1xf32>
    %95 = arith.addf %93, %94 : vector<2x8x1xf32>
    %96 = vector.broadcast %95 : vector<2x8x1xf32> to vector<2x8x128xf32>
    %97 = arith.divf %90, %96 : vector<2x8x128xf32>
    %c0_53 = arith.constant 0 : index
    %c0_54 = arith.constant 0 : index
    %c0_55 = arith.constant 0 : index
    %98 = vector.load %arg9[%c0_53, %c0_54, %c0_55] : memref<2x8x128xf32, #tpu.memory_space<vmem>>, vector<2x8x128xf32>
    tpu.vector_store %arg9[%c0_53, %c0_54, %c0_55], %97 {strides = array<i32>} : memref<2x8x128xf32, #tpu.memory_space<vmem>>, vector<2x8x128xf32>,
    %c2_i32 = arith.constant 2 : i32
    %c0_56 = arith.constant 0 : index
    %c0_57 = arith.constant 0 : index
    %c0_58 = arith.constant 0 : index
    %99 = vector.load %arg9[%c0_56, %c0_57, %c0_58] : memref<2x8x128xf32, #tpu.memory_space<vmem>>, vector<2x8x128xf32>
    %cst_59 = arith.constant dense<0.000000e+00> : vector<2x128xf32>
    %100 = vector.multi_reduction <add>, %99, %cst_59 [1] : vector<2x8x128xf32> to vector<2x128xf32>
    %cst_60 = arith.constant 8.000000e+00 : f32
    %101 = vector.broadcast %cst_60 : f32 to vector<2x128xf32>
    %102 = arith.divf %100, %101 : vector<2x128xf32>
    %103 = arith.addf %0, %102 : vector<2x128xf32>
    %cst_61 = arith.constant dense<0.000000e+00> : vector<2x128xf32>
    %104 = tpu.matmul %103, %3, %cst_61 {dimension_numbers = #tpu.dot_dimension_numbers<[1], [0], [0], [1], [0, 0, 1, 1], [], []>} : vector<2x128xf32>, vector<128x128xf32>, vector<2x128xf32> -> vector<2x128xf32>
    %105 = vector.broadcast %4 : vector<1x128xf32> to vector<2x128xf32>
    %106 = arith.addf %104, %105 : vector<2x128xf32>
    %107 = math.tanh %106 : vector<2x128xf32>
    %cst_62 = arith.constant dense<0.000000e+00> : vector<2x8xf32>
    %108 = tpu.matmul %107, %5, %cst_62 {dimension_numbers = #tpu.dot_dimension_numbers<[1], [0], [0], [1], [0, 0, 1, 1], [], []>} : vector<2x128xf32>, vector<128x8xf32>, vector<2x8xf32> -> vector<2x8xf32>
    %109 = vector.broadcast %6 : vector<1x8xf32> to vector<2x8xf32>
    %110 = arith.addf %108, %109 : vector<2x8xf32>
    %cst_63 = arith.constant dense<0xFF800000> : vector<2xf32>
    %111 = vector.multi_reduction <maximumf>, %110, %cst_63 [1] : vector<2x8xf32> to vector<2xf32>
    %112 = vector.shape_cast %111 : vector<2xf32> to vector<2x1xf32>
    %113 = vector.broadcast %112 : vector<2x1xf32> to vector<2x8xf32>
    %114 = arith.subf %110, %113 : vector<2x8xf32>
    %115 = math.exp %114 : vector<2x8xf32>
    %cst_64 = arith.constant dense<0.000000e+00> : vector<2xf32>
    %116 = vector.multi_reduction <add>, %115, %cst_64 [1] : vector<2x8xf32> to vector<2xf32>
    %117 = vector.shape_cast %116 : vector<2xf32> to vector<2x1xf32>
    %118 = math.log %117 : vector<2x1xf32>
    %119 = vector.broadcast %118 : vector<2x1xf32> to vector<2x8xf32>
    %120 = arith.subf %114, %119 : vector<2x8xf32>
    %121 = math.exp %120 : vector<2x8xf32>
    %122 = arith.subf %121, %1 : vector<2x8xf32>
    %cst_65 = arith.constant 5.000000e-01 : f32
    %123 = vector.broadcast %cst_65 : f32 to vector<2x8xf32>
    %124 = arith.mulf %122, %123 : vector<2x8xf32>
    %cst_66 = arith.constant dense<0.000000e+00> : vector<2x128xf32>
    %125 = tpu.matmul %124, %5, %cst_66 {dimension_numbers = #tpu.dot_dimension_numbers<[1], [1], [0], [0], [0, 0, 1, 0], [], []>} : vector<2x8xf32>, vector<128x8xf32>, vector<2x128xf32> -> vector<2x128xf32>
    %126 = arith.mulf %107, %107 : vector<2x128xf32>
    %cst_67 = arith.constant 1.000000e+00 : f32
    %127 = vector.broadcast %cst_67 : f32 to vector<2x128xf32>
    %128 = arith.subf %127, %126 : vector<2x128xf32>
    %129 = arith.mulf %125, %128 : vector<2x128xf32>
    %cst_68 = arith.constant dense<0.000000e+00> : vector<2x128xf32>
    %130 = tpu.matmul %129, %3, %cst_68 {dimension_numbers = #tpu.dot_dimension_numbers<[1], [1], [0], [0], [0, 0, 1, 0], [], []>} : vector<2x128xf32>, vector<128x128xf32>, vector<2x128xf32> -> vector<2x128xf32>
    %131 = vector.shape_cast %130 : vector<2x128xf32> to vector<2x1x128xf32>
    %cst_69 = arith.constant 1.250000e-04 : f32
    %132 = vector.broadcast %cst_69 : f32 to vector<2x1x128xf32>
    %133 = arith.mulf %132, %131 : vector<2x1x128xf32>
    %134 = vector.broadcast %133 : vector<2x1x128xf32> to vector<2x8x128xf32>
    %135 = arith.addf %99, %134 : vector<2x8x128xf32>
    %136 = math.absf %135 : vector<2x8x128xf32>
    %cst_70 = arith.constant dense<0xFF800000> : vector<2x8xf32>
    %137 = vector.multi_reduction <maximumf>, %136, %cst_70 [2] : vector<2x8x128xf32> to vector<2x8xf32>
    %138 = vector.shape_cast %137 : vector<2x8xf32> to vector<2x8x1xf32>
    %cst_71 = arith.constant 9.99999997E-7 : f32
    %139 = vector.broadcast %cst_71 : f32 to vector<2x8x1xf32>
    %140 = arith.addf %138, %139 : vector<2x8x1xf32>
    %141 = vector.broadcast %140 : vector<2x8x1xf32> to vector<2x8x128xf32>
    %142 = arith.divf %135, %141 : vector<2x8x128xf32>
    %c0_72 = arith.constant 0 : index
    %c0_73 = arith.constant 0 : index
    %c0_74 = arith.constant 0 : index
    %143 = vector.load %arg9[%c0_72, %c0_73, %c0_74] : memref<2x8x128xf32, #tpu.memory_space<vmem>>, vector<2x8x128xf32>
    tpu.vector_store %arg9[%c0_72, %c0_73, %c0_74], %142 {strides = array<i32>} : memref<2x8x128xf32, #tpu.memory_space<vmem>>, vector<2x8x128xf32>,
    %c0_75 = arith.constant 0 : index
    %c0_76 = arith.constant 0 : index
    %c0_77 = arith.constant 0 : index
    %144 = vector.load %arg9[%c0_75, %c0_76, %c0_77] : memref<2x8x128xf32, #tpu.memory_space<vmem>>, vector<2x8x128xf32>
    %cst_78 = arith.constant dense<0.000000e+00> : vector<2x128xf32>
    %145 = vector.multi_reduction <add>, %144, %cst_78 [1] : vector<2x8x128xf32> to vector<2x128xf32>
    %cst_79 = arith.constant 8.000000e+00 : f32
    %146 = vector.broadcast %cst_79 : f32 to vector<2x128xf32>
    %147 = arith.divf %145, %146 : vector<2x128xf32>
    %148 = arith.addf %0, %147 : vector<2x128xf32>
    %cst_80 = arith.constant dense<0.000000e+00> : vector<2x128xf32>
    %149 = tpu.matmul %148, %3, %cst_80 {dimension_numbers = #tpu.dot_dimension_numbers<[1], [0], [0], [1], [0, 0, 1, 1], [], []>} : vector<2x128xf32>, vector<128x128xf32>, vector<2x128xf32> -> vector<2x128xf32>
    %150 = vector.broadcast %4 : vector<1x128xf32> to vector<2x128xf32>
    %151 = arith.addf %149, %150 : vector<2x128xf32>
    %152 = math.tanh %151 : vector<2x128xf32>
    %cst_81 = arith.constant dense<0.000000e+00> : vector<2x8xf32>
    %153 = tpu.matmul %152, %5, %cst_81 {dimension_numbers = #tpu.dot_dimension_numbers<[1], [0], [0], [1], [0, 0, 1, 1], [], []>} : vector<2x128xf32>, vector<128x8xf32>, vector<2x8xf32> -> vector<2x8xf32>
    %154 = vector.broadcast %6 : vector<1x8xf32> to vector<2x8xf32>
    %155 = arith.addf %153, %154 : vector<2x8xf32>
    %cst_82 = arith.constant dense<0xFF800000> : vector<2xf32>
    %156 = vector.multi_reduction <maximumf>, %155, %cst_82 [1] : vector<2x8xf32> to vector<2xf32>
    %157 = vector.shape_cast %156 : vector<2xf32> to vector<2x1xf32>
    %158 = vector.broadcast %157 : vector<2x1xf32> to vector<2x8xf32>
    %159 = arith.subf %155, %158 : vector<2x8xf32>
    %160 = math.exp %159 : vector<2x8xf32>
    %cst_83 = arith.constant dense<0.000000e+00> : vector<2xf32>
    %161 = vector.multi_reduction <add>, %160, %cst_83 [1] : vector<2x8xf32> to vector<2xf32>
    %162 = vector.shape_cast %161 : vector<2xf32> to vector<2x1xf32>
    %163 = math.log %162 : vector<2x1xf32>
    %164 = vector.broadcast %163 : vector<2x1xf32> to vector<2x8xf32>
    %165 = arith.subf %159, %164 : vector<2x8xf32>
    %166 = math.exp %165 : vector<2x8xf32>
    %167 = arith.subf %2, %165 : vector<2x8xf32>
    %168 = arith.mulf %1, %167 : vector<2x8xf32>
    %169 = arith.subf %165, %2 : vector<2x8xf32>
    %170 = arith.mulf %166, %169 : vector<2x8xf32>
    %171 = arith.addf %168, %170 : vector<2x8xf32>
    %172 = vector.shape_cast %171 : vector<2x8xf32> to vector<1x2x8xf32>
    %cst_84 = arith.constant dense<0.000000e+00> : vector<1xf32>
    %173 = vector.multi_reduction <add>, %172, %cst_84 [1, 2] : vector<1x2x8xf32> to vector<1xf32>
    %174 = vector.shape_cast %173 : vector<1xf32> to vector<1x1x1xf32>
    %175 = vector.extract %174[0, 0, 0] : f32 from vector<1x1x1xf32>
    %176 = vector.broadcast %175 : f32 to vector<1x1xf32>
    %cst_85 = arith.constant 5.000000e-01 : f32
    %177 = vector.broadcast %cst_85 : f32 to vector<1x1xf32>
    %178 = arith.mulf %176, %177 : vector<1x1xf32>
    %c0_86 = arith.constant 0 : index
    %c0_87 = arith.constant 0 : index
    %179 = vector.load %arg8[%c0_86, %c0_87] : memref<1x1xf32, #tpu.memory_space<vmem>>, vector<1x1xf32>
    tpu.vector_store %arg8[%c0_86, %c0_87], %178 {strides = array<i32>} : memref<1x1xf32, #tpu.memory_space<vmem>>, vector<1x1xf32>,
    return
  }
}

</mosaic_0001>

<llo_original>
// kernel: tpu_custom_call.1
$region0: #{tpu_custom_call.1}
  #allocation0 [shape = 'u32[]', space=smem, size = 0x4, offset = 0x4, fixed_abs, tag = 'smem constant byte address 0x4 - core index']
  #allocation1 [shape = 'u32[144,128]{1,0:T(1,128)}', space=vmem, size = 0x12000, scoped, tag = 'internal scratch']
  #allocation2 [shape = 'f32[2,8,128]{2,1,0:T(8,128)}', space=vmem, size = 0x2000, scoped, tag = 'scratch operand']
  %s0 = inlined_call_operand.vmem [shape: f32[2,128], index: 0, kind: input, shape index: {}]
  %s1 = inlined_call_operand.hbm [shape: f32[2,8,128], index: 1, kind: input, shape index: {}]
  %s2 = inlined_call_operand.vmem [shape: f32[2,8], index: 2, kind: input, shape index: {}]
  %s3 = inlined_call_operand.vmem [shape: f32[2,8], index: 3, kind: input, shape index: {}]
  %s4 = inlined_call_operand.vmem [shape: f32[128,128], index: 4, kind: input, shape index: {}]
  %s5 = inlined_call_operand.vmem [shape: f32[1,128], index: 5, kind: input, shape index: {}]
  %s6 = inlined_call_operand.vmem [shape: f32[128,8], index: 6, kind: input, shape index: {}]
  %s7 = inlined_call_operand.vmem [shape: f32[1,8], index: 7, kind: input, shape index: {}]
  %s8 = inlined_call_operand.hbm [shape: f32[1,1], index: 8, kind: output, shape index: {}]
  %s9 = sld [smem:[#allocation0]]
  $region46: #{tpu_custom_call.1} parent=0
    _
  %s11 = ssub.s32 1, %s9
  %s12 = scalar_select 0, %s11, %s9
  $region1: #{tpu_custom_call.1} parent=0
    #allocation3 [shape = 'u8[8192]{0}', space=vmem, size = 0x2000, scoped, tag = 'input window, operand 1, single buffered']
    #allocation4 [shape = 's32[1]{0}', space=sflag, size = 0x4, scoped, tag = 'scoped memory for tpu_custom_call.1']
    #allocation5 [shape = 's32[1]{0}', space=sflag, size = 0x4, scoped, tag = 'scoped memory for tpu_custom_call.1']
    #allocation6 [shape = 'u8[512]{0}', space=vmem, size = 0x400, scoped, tag = 'output window, operand 0, single buffered']
    %13 = vsyncpa [#allocation4], 0
    %14 = vsyncpa [#allocation5], 0
    // Predicated region
    $region2: #{tpu_custom_call.1} parent=1 // pred_check
      _
    $region3: #{tpu_custom_call.1} parent=1 // pred_check_branch
      %16 = sbr.rel (0) target = $region5
    $region4: #{tpu_custom_call.1} parent=1 // pred_region
      _
    $region5: #{tpu_custom_call.1} parent=1 // pred_fallthru
      _
    // Predicated region
    $region6: #{tpu_custom_call.1} parent=1 // pred_check
      _
    $region7: #{tpu_custom_call.1} parent=1 // pred_check_branch
      %18 = sbr.rel (0) target = $region9
    $region8: #{tpu_custom_call.1} parent=1 // pred_region
      %s20 = ssub.s32 256, 256
      %21 = vsyncadd [#allocation4], %s20
      %s22 = sshll.u32 [#allocation3], 4
      %s23 = int_to_ptr.vmem [resolvable:$true] %s22
      %28 = dma.hbm_to_vmem [thread:$0]  %s1, 256, %s23, [#allocation4], 128, 128, 8
    $region9: #{tpu_custom_call.1} parent=1 // pred_fallthru
      _
    // Predicated region
    $region10: #{tpu_custom_call.1} parent=1 // pred_check
      _
    $region11: #{tpu_custom_call.1} parent=1 // pred_check_branch
      %30 = sbr.rel (0) target = $region13
    $region12: #{tpu_custom_call.1} parent=1 // pred_region
      _
    $region13: #{tpu_custom_call.1} parent=1 // pred_fallthru
      _
    // Predicated region
    $region14: #{tpu_custom_call.1} parent=1 // pred_check
      _
    $region15: #{tpu_custom_call.1} parent=1 // pred_check_branch
      %32 = sbr.rel (0) target = $region17
    $region16: #{tpu_custom_call.1} parent=1 // pred_region
      _
    $region17: #{tpu_custom_call.1} parent=1 // pred_fallthru
      _
    // Predicated region
    $region18: #{tpu_custom_call.1} parent=1 // pred_check
      _
    $region19: #{tpu_custom_call.1} parent=1 // pred_check_branch
      %34 = sbr.rel (0) target = $region21
    $region20: #{tpu_custom_call.1} parent=1 // pred_region
      _
    $region21: #{tpu_custom_call.1} parent=1 // pred_fallthru
      _
    // Predicated region
    $region22: #{tpu_custom_call.1} parent=1 // pred_check
      _
    $region23: #{tpu_custom_call.1} parent=1 // pred_check_branch
      %36 = sbr.rel (0) target = $region25
    $region24: #{tpu_custom_call.1} parent=1 // pred_region
      _
    $region25: #{tpu_custom_call.1} parent=1 // pred_fallthru
      _
    // Predicated region
    $region26: #{tpu_custom_call.1} parent=1 // pred_check
      _
    $region27: #{tpu_custom_call.1} parent=1 // pred_check_branch
      %38 = sbr.rel (0) target = $region29
    $region28: #{tpu_custom_call.1} parent=1 // pred_region
      _
    $region29: #{tpu_custom_call.1} parent=1 // pred_fallthru
      _
    // Predicated region
    $region30: #{tpu_custom_call.1} parent=1 // pred_check
      _
    $region31: #{tpu_custom_call.1} parent=1 // pred_check_branch
      %40 = sbr.rel (0) target = $region33
    $region32: #{tpu_custom_call.1} parent=1 // pred_region
      _
    $region33: #{tpu_custom_call.1} parent=1 // pred_fallthru
      _
    // Predicated region
    $region34: #{tpu_custom_call.1} parent=1 // pred_check
      _
    $region35: #{tpu_custom_call.1} parent=1 // pred_check_branch
      %42 = sbr.rel (0) target = $region37
    $region36: #{tpu_custom_call.1} parent=1 // pred_region
      %43 = dma.done [#allocation4], 256
    $region37: #{tpu_custom_call.1} parent=1 // pred_fallthru
      _
    %v44 = vld [vmem:[%s0] sm:$0x3]
    %v45 = vld [vmem:[%s2] sm:$0x3]
    %v46 = vld [vmem:[%s3] sm:$0x3]
    %v47 = vld [vmem:[%s4] sm:$0xff]
    %v48 = vld [vmem:[%s4 + $0x8] sm:$0xff]
    %v49 = vld [vmem:[%s4 + $0x10] sm:$0xff]
    %v50 = vld [vmem:[%s4 + $0x18] sm:$0xff]
    %v51 = vld [vmem:[%s4 + $0x20] sm:$0xff]
    %v52 = vld [vmem:[%s4 + $0x28] sm:$0xff]
    %v53 = vld [vmem:[%s4 + $0x30] sm:$0xff]
    %v54 = vld [vmem:[%s4 + $0x38] sm:$0xff]
    %v55 = vld [vmem:[%s4 + $0x40] sm:$0xff]
    %v56 = vld [vmem:[%s4 + $0x48] sm:$0xff]
    %v57 = vld [vmem:[%s4 + $0x50] sm:$0xff]
    %v58 = vld [vmem:[%s4 + $0x58] sm:$0xff]
    %v59 = vld [vmem:[%s4 + $0x60] sm:$0xff]
    %v60 = vld [vmem:[%s4 + $0x68] sm:$0xff]
    %v61 = vld [vmem:[%s4 + $0x70] sm:$0xff]
    %v62 = vld [vmem:[%s4 + $0x78] sm:$0xff]
    %v63 = vld [vmem:[%s5] sm:$0x1]
    %v64 = vld [vmem:[%s6] sm:$0xff]
    %v65 = vld [vmem:[%s6 + $0x8] sm:$0xff]
    %v66 = vld [vmem:[%s6 + $0x10] sm:$0xff]
    %v67 = vld [vmem:[%s6 + $0x18] sm:$0xff]
    %v68 = vld [vmem:[%s6 + $0x20] sm:$0xff]
    %v69 = vld [vmem:[%s6 + $0x28] sm:$0xff]
    %v70 = vld [vmem:[%s6 + $0x30] sm:$0xff]
    %v71 = vld [vmem:[%s6 + $0x38] sm:$0xff]
    %v72 = vld [vmem:[%s6 + $0x40] sm:$0xff]
    %v73 = vld [vmem:[%s6 + $0x48] sm:$0xff]
    %v74 = vld [vmem:[%s6 + $0x50] sm:$0xff]
    %v75 = vld [vmem:[%s6 + $0x58] sm:$0xff]
    %v76 = vld [vmem:[%s6 + $0x60] sm:$0xff]
    %v77 = vld [vmem:[%s6 + $0x68] sm:$0xff]
    %v78 = vld [vmem:[%s6 + $0x70] sm:$0xff]
    %v79 = vld [vmem:[%s6 + $0x78] sm:$0xff]
    %v80 = vld [vmem:[%s7] sm:$0x1]
    %v81 = vld [vmem:[#allocation3] sm:$0xff]
    %v82 = vld [vmem:[#allocation3 + $0x8] sm:$0xff]
    %83 = vst [vmem:[#allocation2] sm:$0xff] %v81
    %84 = vst [vmem:[#allocation2 + $0x8] sm:$0xff] %v82
    %v85 = vld [vmem:[#allocation2] sm:$0xff]
    %v86 = vld [vmem:[#allocation2 + $0x8] sm:$0xff]
    %v87 = vrot.slane %v85, 4
    %v88 = vadd.f32 %v85, %v87
    %v89 = vrot.slane %v88, 2
    %v90 = vadd.f32 %v88, %v89
    %v91 = vrot.slane %v90, 1
    %v92 = vadd.f32 %v90, %v91
    %v93 = vrot.slane %v86, 4
    %v94 = vadd.f32 %v86, %v93
    %v95 = vrot.slane %v94, 2
    %v96 = vadd.f32 %v94, %v95
    %v97 = vrot.slane %v96, 1
    %v98 = vadd.f32 %v96, %v97
    %v99 = vrcp.pop 8.0
    %v100 = vmul.f32 %v92, %v99
    %v101 = vmul.f32 %v98, %v99
    %vm104 = vcmask 1041409
    %v105 = vsel %vm104, %v101, %v100
    %v107 = vadd.f32 %v44, %v105
    %v109 = vlaneseq
    %v110 = vshrl.u32 %v109, 7
    %v111 = vsub.s32 0, %v110
    %v112 = vrot.slane %v63, %v111
    %114 = vmatprep.subr.mxu0 0.0
    %115 = vmatpush1.msra.mxu0 %v62
    %116 = vmatprep.subr.mxu0 0.0
    %117 = vmatpush1.msra.mxu0 %v61
    %118 = vmatprep.subr.mxu0 0.0
    %119 = vmatpush1.msra.mxu0 %v60
    %120 = vmatprep.subr.mxu0 0.0
    %121 = vmatpush1.msra.mxu0 %v59
    %122 = vmatprep.subr.mxu0 0.0
    %123 = vmatpush1.msra.mxu0 %v58
    %124 = vmatprep.subr.mxu0 0.0
    %125 = vmatpush1.msra.mxu0 %v57
    %126 = vmatprep.subr.mxu0 0.0
    %127 = vmatpush1.msra.mxu0 %v56
    %128 = vmatprep.subr.mxu0 0.0
    %129 = vmatpush1.msra.mxu0 %v55
    %130 = vmatprep.subr.mxu0 0.0
    %131 = vmatpush1.msra.mxu0 %v54
    %132 = vmatprep.subr.mxu0 0.0
    %133 = vmatpush1.msra.mxu0 %v53
    %134 = vmatprep.subr.mxu0 0.0
    %135 = vmatpush1.msra.mxu0 %v52
    %136 = vmatprep.subr.mxu0 0.0
    %137 = vmatpush1.msra.mxu0 %v51
    %138 = vmatprep.subr.mxu0 0.0
    %139 = vmatpush1.msra.mxu0 %v50
    %140 = vmatprep.subr.mxu0 0.0
    %141 = vmatpush1.msra.mxu0 %v49
    %142 = vmatprep.subr.mxu0 0.0
    %143 = vmatpush1.msra.mxu0 %v48
    %144 = vmatprep.subr.mxu0 0.0
    %145 = vmatpush1.msra.mxu0 %v47
    %146 = vmatprep.subr.mxu0 0.0
    %147 = vmatpush2.msra.mxu0 0.0
    %148 = vmatprep.subr.mxu0 0.0
    %149 = vmatpush2.msra.mxu0 0.0
    %150 = vmatprep.subr.mxu0 0.0
    %151 = vmatpush2.msra.mxu0 0.0
    %152 = vmatprep.subr.mxu0 0.0
    %153 = vmatpush2.msra.mxu0 0.0
    %154 = vmatprep.subr.mxu0 0.0
    %155 = vmatpush2.msra.mxu0 0.0
    %156 = vmatprep.subr.mxu0 0.0
    %157 = vmatpush2.msra.mxu0 0.0
    %158 = vmatprep.subr.mxu0 0.0
    %159 = vmatpush2.msra.mxu0 0.0
    %160 = vmatprep.subr.mxu0 0.0
    %161 = vmatpush2.msra.mxu0 0.0
    %162 = vmatprep.subr.mxu0 0.0
    %163 = vmatpush2.msra.mxu0 0.0
    %164 = vmatprep.subr.mxu0 0.0
    %165 = vmatpush2.msra.mxu0 0.0
    %166 = vmatprep.subr.mxu0 0.0
    %167 = vmatpush2.msra.mxu0 0.0
    %168 = vmatprep.subr.mxu0 0.0
    %169 = vmatpush2.msra.mxu0 0.0
    %170 = vmatprep.subr.mxu0 0.0
    %171 = vmatpush2.msra.mxu0 0.0
    %172 = vmatprep.subr.mxu0 0.0
    %173 = vmatpush2.msra.mxu0 0.0
    %174 = vmatprep.subr.mxu0 0.0
    %175 = vmatpush2.msra.mxu0 0.0
    %176 = vmatprep.subr.mxu0 0.0
    %177 = vmatpush2.msra.mxu0 0.0
    %178 = vmatprep.mubr.f32.mxu0 0.0
    %179 = vmatmul.mubr.f32.gmra.mxu0 %v107
    %v180 = vpop.f32.mrf.mxu0
    %v181 = vadd.f32 %v112, %v180
    %v182 = vpop.f32.mrf.mxu0
    %183 = vdwg.mxu0
    %v184 = vtanh.pop %v181
    %v186 = vlaneseq
    %v187 = vshrl.u32 %v186, 7
    %v188 = vsub.s32 0, %v187
    %v189 = vrot.slane %v80, %v188
    %191 = vmatprep.subr.mxu0 0.0
    %192 = vmatpush1.msra.mxu0 %v79
    %193 = vmatprep.subr.mxu0 0.0
    %194 = vmatpush1.msra.mxu0 %v78
    %195 = vmatprep.subr.mxu0 0.0
    %196 = vmatpush1.msra.mxu0 %v77
    %197 = vmatprep.subr.mxu0 0.0
    %198 = vmatpush1.msra.mxu0 %v76
    %199 = vmatprep.subr.mxu0 0.0
    %200 = vmatpush1.msra.mxu0 %v75
    %201 = vmatprep.subr.mxu0 0.0
    %202 = vmatpush1.msra.mxu0 %v74
    %203 = vmatprep.subr.mxu0 0.0
    %204 = vmatpush1.msra.mxu0 %v73
    %205 = vmatprep.subr.mxu0 0.0
    %206 = vmatpush1.msra.mxu0 %v72
    %207 = vmatprep.subr.mxu0 0.0
    %208 = vmatpush1.msra.mxu0 %v71
    %209 = vmatprep.subr.mxu0 0.0
    %210 = vmatpush1.msra.mxu0 %v70
    %211 = vmatprep.subr.mxu0 0.0
    %212 = vmatpush1.msra.mxu0 %v69
    %213 = vmatprep.subr.mxu0 0.0
    %214 = vmatpush1.msra.mxu0 %v68
    %215 = vmatprep.subr.mxu0 0.0
    %216 = vmatpush1.msra.mxu0 %v67
    %217 = vmatprep.subr.mxu0 0.0
    %218 = vmatpush1.msra.mxu0 %v66
    %219 = vmatprep.subr.mxu0 0.0
    %220 = vmatpush1.msra.mxu0 %v65
    %221 = vmatprep.subr.mxu0 0.0
    %222 = vmatpush1.msra.mxu0 %v64
    %223 = vmatprep.subr.mxu0 0.0
    %224 = vmatpush2.msra.mxu0 0.0
    %225 = vmatprep.subr.mxu0 0.0
    %226 = vmatpush2.msra.mxu0 0.0
    %227 = vmatprep.subr.mxu0 0.0
    %228 = vmatpush2.msra.mxu0 0.0
    %229 = vmatprep.subr.mxu0 0.0
    %230 = vmatpush2.msra.mxu0 0.0
    %231 = vmatprep.subr.mxu0 0.0
    %232 = vmatpush2.msra.mxu0 0.0
    %233 = vmatprep.subr.mxu0 0.0
    %234 = vmatpush2.msra.mxu0 0.0
    %235 = vmatprep.subr.mxu0 0.0
    %236 = vmatpush2.msra.mxu0 0.0
    %237 = vmatprep.subr.mxu0 0.0
    %238 = vmatpush2.msra.mxu0 0.0
    %239 = vmatprep.subr.mxu0 0.0
    %240 = vmatpush2.msra.mxu0 0.0
    %241 = vmatprep.subr.mxu0 0.0
    %242 = vmatpush2.msra.mxu0 0.0
    %243 = vmatprep.subr.mxu0 0.0
    %244 = vmatpush2.msra.mxu0 0.0
    %245 = vmatprep.subr.mxu0 0.0
    %246 = vmatpush2.msra.mxu0 0.0
    %247 = vmatprep.subr.mxu0 0.0
    %248 = vmatpush2.msra.mxu0 0.0
    %249 = vmatprep.subr.mxu0 0.0
    %250 = vmatpush2.msra.mxu0 0.0
    %251 = vmatprep.subr.mxu0 0.0
    %252 = vmatpush2.msra.mxu0 0.0
    %253 = vmatprep.subr.mxu0 0.0
    %254 = vmatpush2.msra.mxu0 0.0
    %255 = vmatprep.mubr.f32.mxu0 0.0
    %256 = vmatmul.mubr.f32.gmra.mxu0 %v184
    %v257 = vpop.f32.mrf.mxu0
    %v258 = vadd.f32 %v189, %v257
    %v259 = vpop.f32.mrf.mxu0
    %260 = vdwg.mxu0
    %vm261 = vcmask 58368
    %v262 = vsel %vm261, %v258, -inf
    %263 = vmax.xlane.f32.xlu0 %v262
    %v264 = vpop.xlane.xlu0 %263
    %v265 = vsub.f32 %v258, %v264
    %v266 = vmul.f32 %v265, 1.442695
    %v267 = vpow.pop %v266
    %v268 = vsel %vm261, %v267, 0.0
    %269 = vadd.xlane.f32.xlu0 %v268
    %v270 = vpop.xlane.xlu0 %269
    %v271 = vlog2.pop %v270
    %v272 = vmul.f32 %v271, 0.6931472
    %v273 = vsub.f32 %v265, %v272
    %v274 = vmul.f32 %v273, 1.442695
    %v275 = vpow.pop %v274
    %v276 = vsub.f32 %v275, %v45
    %v277 = vmul.f32 %v276, 0.5
    %vm278 = vcmask 64512
    %v280 = vsel %vm278, %v277, 0
    %v283 = vsel %vm278, %v64, 0
    %v286 = vsel %vm278, %v65, 0
    %v289 = vsel %vm278, %v66, 0
    %v292 = vsel %vm278, %v67, 0
    %v295 = vsel %vm278, %v68, 0
    %v298 = vsel %vm278, %v69, 0
    %v301 = vsel %vm278, %v70, 0
    %v304 = vsel %vm278, %v71, 0
    %v307 = vsel %vm278, %v72, 0
    %v310 = vsel %vm278, %v73, 0
    %v313 = vsel %vm278, %v74, 0
    %v316 = vsel %vm278, %v75, 0
    %v319 = vsel %vm278, %v76, 0
    %v322 = vsel %vm278, %v77, 0
    %v325 = vsel %vm278, %v78, 0
    %v328 = vsel %vm278, %v79, 0
    %330 = vmatprep.subr.mxu0 0.0
    %331 = vmatpush1.xpose.msra.mxu0 %v328
    %332 = vmatprep.subr.mxu0 0.0
    %333 = vmatpush1.xpose.msra.mxu0 %v325
    %334 = vmatprep.subr.mxu0 0.0
    %335 = vmatpush1.xpose.msra.mxu0 %v322
    %336 = vmatprep.subr.mxu0 0.0
    %337 = vmatpush1.xpose.msra.mxu0 %v319
    %338 = vmatprep.subr.mxu0 0.0
    %339 = vmatpush1.xpose.msra.mxu0 %v316
    %340 = vmatprep.subr.mxu0 0.0
    %341 = vmatpush1.xpose.msra.mxu0 %v313
    %342 = vmatprep.subr.mxu0 0.0
    %343 = vmatpush1.xpose.msra.mxu0 %v310
    %344 = vmatprep.subr.mxu0 0.0
    %345 = vmatpush1.xpose.msra.mxu0 %v307
    %346 = vmatprep.subr.mxu0 0.0
    %347 = vmatpush1.xpose.msra.mxu0 %v304
    %348 = vmatprep.subr.mxu0 0.0
    %349 = vmatpush1.xpose.msra.mxu0 %v301
    %350 = vmatprep.subr.mxu0 0.0
    %351 = vmatpush1.xpose.msra.mxu0 %v298
    %352 = vmatprep.subr.mxu0 0.0
    %353 = vmatpush1.xpose.msra.mxu0 %v295
    %354 = vmatprep.subr.mxu0 0.0
    %355 = vmatpush1.xpose.msra.mxu0 %v292
    %356 = vmatprep.subr.mxu0 0.0
    %357 = vmatpush1.xpose.msra.mxu0 %v289
    %358 = vmatprep.subr.mxu0 0.0
    %359 = vmatpush1.xpose.msra.mxu0 %v286
    %360 = vmatprep.subr.mxu0 0.0
    %361 = vmatpush1.xpose.msra.mxu0 %v283
    %362 = vmatprep.subr.mxu0 0.0
    %363 = vmatpush2.xpose.msra.mxu0 0.0
    %364 = vmatprep.subr.mxu0 0.0
    %365 = vmatpush2.xpose.msra.mxu0 0.0
    %366 = vmatprep.subr.mxu0 0.0
    %367 = vmatpush2.xpose.msra.mxu0 0.0
    %368 = vmatprep.subr.mxu0 0.0
    %369 = vmatpush2.xpose.msra.mxu0 0.0
    %370 = vmatprep.subr.mxu0 0.0
    %371 = vmatpush2.xpose.msra.mxu0 0.0
    %372 = vmatprep.subr.mxu0 0.0
    %373 = vmatpush2.xpose.msra.mxu0 0.0
    %374 = vmatprep.subr.mxu0 0.0
    %375 = vmatpush2.xpose.msra.mxu0 0.0
    %376 = vmatprep.subr.mxu0 0.0
    %377 = vmatpush2.xpose.msra.mxu0 0.0
    %378 = vmatprep.subr.mxu0 0.0
    %379 = vmatpush2.xpose.msra.mxu0 0.0
    %380 = vmatprep.subr.mxu0 0.0
    %381 = vmatpush2.xpose.msra.mxu0 0.0
    %382 = vmatprep.subr.mxu0 0.0
    %383 = vmatpush2.xpose.msra.mxu0 0.0
    %384 = vmatprep.subr.mxu0 0.0
    %385 = vmatpush2.xpose.msra.mxu0 0.0
    %386 = vmatprep.subr.mxu0 0.0
    %387 = vmatpush2.xpose.msra.mxu0 0.0
    %388 = vmatprep.subr.mxu0 0.0
    %389 = vmatpush2.xpose.msra.mxu0 0.0
    %390 = vmatprep.subr.mxu0 0.0
    %391 = vmatpush2.xpose.msra.mxu0 0.0
    %392 = vmatprep.subr.mxu0 0.0
    %393 = vmatpush2.xpose.msra.mxu0 0.0
    %394 = vmatprep.mubr.f32.mxu0 0.0
    %395 = vmatmul.mubr.f32.gmra.mxu0 %v280
    %v396 = vpop.f32.mrf.mxu0
    %v397 = vadd.f32 0.0, %v396
    %v398 = vpop.f32.mrf.mxu0
    %399 = vdwg.mxu0
    %v400 = vmul.f32 %v184, %v184
    %v401 = vsub.f32 1.0, %v400
    %v402 = vmul.f32 %v397, %v401
    %403 = vmatprep.subr.mxu0 0.0
    %404 = vmatpush1.xpose.msra.mxu0 %v62
    %405 = vmatprep.subr.mxu0 0.0
    %406 = vmatpush1.xpose.msra.mxu0 %v61
    %407 = vmatprep.subr.mxu0 0.0
    %408 = vmatpush1.xpose.msra.mxu0 %v60
    %409 = vmatprep.subr.mxu0 0.0
    %410 = vmatpush1.xpose.msra.mxu0 %v59
    %411 = vmatprep.subr.mxu0 0.0
    %412 = vmatpush1.xpose.msra.mxu0 %v58
    %413 = vmatprep.subr.mxu0 0.0
    %414 = vmatpush1.xpose.msra.mxu0 %v57
    %415 = vmatprep.subr.mxu0 0.0
    %416 = vmatpush1.xpose.msra.mxu0 %v56
    %417 = vmatprep.subr.mxu0 0.0
    %418 = vmatpush1.xpose.msra.mxu0 %v55
    %419 = vmatprep.subr.mxu0 0.0
    %420 = vmatpush1.xpose.msra.mxu0 %v54
    %421 = vmatprep.subr.mxu0 0.0
    %422 = vmatpush1.xpose.msra.mxu0 %v53
    %423 = vmatprep.subr.mxu0 0.0
    %424 = vmatpush1.xpose.msra.mxu0 %v52
    %425 = vmatprep.subr.mxu0 0.0
    %426 = vmatpush1.xpose.msra.mxu0 %v51
    %427 = vmatprep.subr.mxu0 0.0
    %428 = vmatpush1.xpose.msra.mxu0 %v50
    %429 = vmatprep.subr.mxu0 0.0
    %430 = vmatpush1.xpose.msra.mxu0 %v49
    %431 = vmatprep.subr.mxu0 0.0
    %432 = vmatpush1.xpose.msra.mxu0 %v48
    %433 = vmatprep.subr.mxu0 0.0
    %434 = vmatpush1.xpose.msra.mxu0 %v47
    %435 = vmatprep.subr.mxu0 0.0
    %436 = vmatpush2.xpose.msra.mxu0 0.0
    %437 = vmatprep.subr.mxu0 0.0
    %438 = vmatpush2.xpose.msra.mxu0 0.0
    %439 = vmatprep.subr.mxu0 0.0
    %440 = vmatpush2.xpose.msra.mxu0 0.0
    %441 = vmatprep.subr.mxu0 0.0
    %442 = vmatpush2.xpose.msra.mxu0 0.0
    %443 = vmatprep.subr.mxu0 0.0
    %444 = vmatpush2.xpose.msra.mxu0 0.0
    %445 = vmatprep.subr.mxu0 0.0
    %446 = vmatpush2.xpose.msra.mxu0 0.0
    %447 = vmatprep.subr.mxu0 0.0
    %448 = vmatpush2.xpose.msra.mxu0 0.0
    %449 = vmatprep.subr.mxu0 0.0
    %450 = vmatpush2.xpose.msra.mxu0 0.0
    %451 = vmatprep.subr.mxu0 0.0
    %452 = vmatpush2.xpose.msra.mxu0 0.0
    %453 = vmatprep.subr.mxu0 0.0
    %454 = vmatpush2.xpose.msra.mxu0 0.0
    %455 = vmatprep.subr.mxu0 0.0
    %456 = vmatpush2.xpose.msra.mxu0 0.0
    %457 = vmatprep.subr.mxu0 0.0
    %458 = vmatpush2.xpose.msra.mxu0 0.0
    %459 = vmatprep.subr.mxu0 0.0
    %460 = vmatpush2.xpose.msra.mxu0 0.0
    %461 = vmatprep.subr.mxu0 0.0
    %462 = vmatpush2.xpose.msra.mxu0 0.0
    %463 = vmatprep.subr.mxu0 0.0
    %464 = vmatpush2.xpose.msra.mxu0 0.0
    %465 = vmatprep.subr.mxu0 0.0
    %466 = vmatpush2.xpose.msra.mxu0 0.0
    %467 = vmatprep.mubr.f32.mxu0 0.0
    %468 = vmatmul.mubr.f32.gmra.mxu0 %v402
    %v469 = vpop.f32.mrf.mxu0
    %v470 = vadd.f32 0.0, %v469
    %v471 = vpop.f32.mrf.mxu0
    %472 = vdwg.mxu0
    %v475 = vunpack.c.l.s4 1966171168
    %v476 = vunpack.c.0.s8 %v475
    %v477 = vlaneseq
    %v478 = vshrl.u32 %v477, 7
    %v479 = vsub.s32 %v476, %v478
    %v480 = vrot.slane %v470, %v479
    %v481 = vcombine.high %v480, %v480
    %v483 = vunpack.c.l.s4 1966171168
    %v484 = vunpack.c.0.s8 %v483
    %v485 = vlaneseq
    %v486 = vshrl.u32 %v485, 7
    %v487 = vsub.s32 %v484, %v486
    %v488 = vrot.slane %v480, %v487
    %v490 = vunpack.c.l.s4 1966171168
    %v491 = vunpack.c.0.s8 %v490
    %v492 = vlaneseq
    %v493 = vshrl.u32 %v492, 7
    %v494 = vsub.s32 %v491, %v493
    %v495 = vrot.slane %v481, %v494
    %v498 = vmul.f32 %v488, 0.000125
    %v499 = vmul.f32 %v495, 0.000125
    %v502 = vlaneseq
    %v503 = vshrl.u32 %v502, 7
    %v504 = vsub.s32 0, %v503
    %v505 = vrot.slane %v498, %v504
    %v506 = vlaneseq
    %v507 = vshrl.u32 %v506, 7
    %v508 = vsub.s32 0, %v507
    %v509 = vrot.slane %v499, %v508
    %v512 = vadd.f32 %v85, %v505
    %v513 = vadd.f32 %v86, %v509
    %v514 = vand.u32 2147483647, %v512
    %v515 = vand.u32 2147483647, %v513
    %516 = vmax.xlane.f32.xlu0 %v514
    %v517 = vpop.xlane.xlu0 %516
    %518 = vmax.xlane.f32.xlu0 %v515
    %v519 = vpop.xlane.xlu0 %518
    %v520 = vadd.f32 %v517, 1e-06
    %v521 = vadd.f32 %v519, 1e-06
    %v522 = vrcp.pop %v520
    %v523 = vmul.f32 %v512, %v522
    %v524 = vrcp.pop %v521
    %v525 = vmul.f32 %v513, %v524
    %526 = vst [vmem:[#allocation2] sm:$0xff] %v523
    %527 = vst [vmem:[#allocation2 + $0x8] sm:$0xff] %v525
    %v528 = vld [vmem:[#allocation2] sm:$0xff]
    %v529 = vld [vmem:[#allocation2 + $0x8] sm:$0xff]
    %v530 = vrot.slane %v528, 4
    %v531 = vadd.f32 %v528, %v530
    %v532 = vrot.slane %v531, 2
    %v533 = vadd.f32 %v531, %v532
    %v534 = vrot.slane %v533, 1
    %v535 = vadd.f32 %v533, %v534
    %v536 = vrot.slane %v529, 4
    %v537 = vadd.f32 %v529, %v536
    %v538 = vrot.slane %v537, 2
    %v539 = vadd.f32 %v537, %v538
    %v540 = vrot.slane %v539, 1
    %v541 = vadd.f32 %v539, %v540
    %v542 = vmul.f32 %v535, %v99
    %v543 = vmul.f32 %v541, %v99
    %v546 = vsel %vm104, %v543, %v542
    %v548 = vadd.f32 %v44, %v546
    %549 = vmatprep.subr.mxu0 0.0
    %550 = vmatpush1.msra.mxu0 %v62
    %551 = vmatprep.subr.mxu0 0.0
    %552 = vmatpush1.msra.mxu0 %v61
    %553 = vmatprep.subr.mxu0 0.0
    %554 = vmatpush1.msra.mxu0 %v60
    %555 = vmatprep.subr.mxu0 0.0
    %556 = vmatpush1.msra.mxu0 %v59
    %557 = vmatprep.subr.mxu0 0.0
    %558 = vmatpush1.msra.mxu0 %v58
    %559 = vmatprep.subr.mxu0 0.0
    %560 = vmatpush1.msra.mxu0 %v57
    %561 = vmatprep.subr.mxu0 0.0
    %562 = vmatpush1.msra.mxu0 %v56
    %563 = vmatprep.subr.mxu0 0.0
    %564 = vmatpush1.msra.mxu0 %v55
    %565 = vmatprep.subr.mxu0 0.0
    %566 = vmatpush1.msra.mxu0 %v54
    %567 = vmatprep.subr.mxu0 0.0
    %568 = vmatpush1.msra.mxu0 %v53
    %569 = vmatprep.subr.mxu0 0.0
    %570 = vmatpush1.msra.mxu0 %v52
    %571 = vmatprep.subr.mxu0 0.0
    %572 = vmatpush1.msra.mxu0 %v51
    %573 = vmatprep.subr.mxu0 0.0
    %574 = vmatpush1.msra.mxu0 %v50
    %575 = vmatprep.subr.mxu0 0.0
    %576 = vmatpush1.msra.mxu0 %v49
    %577 = vmatprep.subr.mxu0 0.0
    %578 = vmatpush1.msra.mxu0 %v48
    %579 = vmatprep.subr.mxu0 0.0
    %580 = vmatpush1.msra.mxu0 %v47
    %581 = vmatprep.subr.mxu0 0.0
    %582 = vmatpush2.msra.mxu0 0.0
    %583 = vmatprep.subr.mxu0 0.0
    %584 = vmatpush2.msra.mxu0 0.0
    %585 = vmatprep.subr.mxu0 0.0
    %586 = vmatpush2.msra.mxu0 0.0
    %587 = vmatprep.subr.mxu0 0.0
    %588 = vmatpush2.msra.mxu0 0.0
    %589 = vmatprep.subr.mxu0 0.0
    %590 = vmatpush2.msra.mxu0 0.0
    %591 = vmatprep.subr.mxu0 0.0
    %592 = vmatpush2.msra.mxu0 0.0
    %593 = vmatprep.subr.mxu0 0.0
    %594 = vmatpush2.msra.mxu0 0.0
    %595 = vmatprep.subr.mxu0 0.0
    %596 = vmatpush2.msra.mxu0 0.0
    %597 = vmatprep.subr.mxu0 0.0
    %598 = vmatpush2.msra.mxu0 0.0
    %599 = vmatprep.subr.mxu0 0.0
    %600 = vmatpush2.msra.mxu0 0.0
    %601 = vmatprep.subr.mxu0 0.0
    %602 = vmatpush2.msra.mxu0 0.0
    %603 = vmatprep.subr.mxu0 0.0
    %604 = vmatpush2.msra.mxu0 0.0
    %605 = vmatprep.subr.mxu0 0.0
    %606 = vmatpush2.msra.mxu0 0.0
    %607 = vmatprep.subr.mxu0 0.0
    %608 = vmatpush2.msra.mxu0 0.0
    %609 = vmatprep.subr.mxu0 0.0
    %610 = vmatpush2.msra.mxu0 0.0
    %611 = vmatprep.subr.mxu0 0.0
    %612 = vmatpush2.msra.mxu0 0.0
    %613 = vmatprep.mubr.f32.mxu0 0.0
    %614 = vmatmul.mubr.f32.gmra.mxu0 %v548
    %v615 = vpop.f32.mrf.mxu0
    %v616 = vadd.f32 %v112, %v615
    %v617 = vpop.f32.mrf.mxu0
    %618 = vdwg.mxu0
    %v619 = vtanh.pop %v616
    %620 = vmatprep.subr.mxu0 0.0
    %621 = vmatpush1.msra.mxu0 %v79
    %622 = vmatprep.subr.mxu0 0.0
    %623 = vmatpush1.msra.mxu0 %v78
    %624 = vmatprep.subr.mxu0 0.0
    %625 = vmatpush1.msra.mxu0 %v77
    %626 = vmatprep.subr.mxu0 0.0
    %627 = vmatpush1.msra.mxu0 %v76
    %628 = vmatprep.subr.mxu0 0.0
    %629 = vmatpush1.msra.mxu0 %v75
    %630 = vmatprep.subr.mxu0 0.0
    %631 = vmatpush1.msra.mxu0 %v74
    %632 = vmatprep.subr.mxu0 0.0
    %633 = vmatpush1.msra.mxu0 %v73
    %634 = vmatprep.subr.mxu0 0.0
    %635 = vmatpush1.msra.mxu0 %v72
    %636 = vmatprep.subr.mxu0 0.0
    %637 = vmatpush1.msra.mxu0 %v71
    %638 = vmatprep.subr.mxu0 0.0
    %639 = vmatpush1.msra.mxu0 %v70
    %640 = vmatprep.subr.mxu0 0.0
    %641 = vmatpush1.msra.mxu0 %v69
    %642 = vmatprep.subr.mxu0 0.0
    %643 = vmatpush1.msra.mxu0 %v68
    %644 = vmatprep.subr.mxu0 0.0
    %645 = vmatpush1.msra.mxu0 %v67
    %646 = vmatprep.subr.mxu0 0.0
    %647 = vmatpush1.msra.mxu0 %v66
    %648 = vmatprep.subr.mxu0 0.0
    %649 = vmatpush1.msra.mxu0 %v65
    %650 = vmatprep.subr.mxu0 0.0
    %651 = vmatpush1.msra.mxu0 %v64
    %652 = vmatprep.subr.mxu0 0.0
    %653 = vmatpush2.msra.mxu0 0.0
    %654 = vmatprep.subr.mxu0 0.0
    %655 = vmatpush2.msra.mxu0 0.0
    %656 = vmatprep.subr.mxu0 0.0
    %657 = vmatpush2.msra.mxu0 0.0
    %658 = vmatprep.subr.mxu0 0.0
    %659 = vmatpush2.msra.mxu0 0.0
    %660 = vmatprep.subr.mxu0 0.0
    %661 = vmatpush2.msra.mxu0 0.0
    %662 = vmatprep.subr.mxu0 0.0
    %663 = vmatpush2.msra.mxu0 0.0
    %664 = vmatprep.subr.mxu0 0.0
    %665 = vmatpush2.msra.mxu0 0.0
    %666 = vmatprep.subr.mxu0 0.0
    %667 = vmatpush2.msra.mxu0 0.0
    %668 = vmatprep.subr.mxu0 0.0
    %669 = vmatpush2.msra.mxu0 0.0
    %670 = vmatprep.subr.mxu0 0.0
    %671 = vmatpush2.msra.mxu0 0.0
    %672 = vmatprep.subr.mxu0 0.0
    %673 = vmatpush2.msra.mxu0 0.0
    %674 = vmatprep.subr.mxu0 0.0
    %675 = vmatpush2.msra.mxu0 0.0
    %676 = vmatprep.subr.mxu0 0.0
    %677 = vmatpush2.msra.mxu0 0.0
    %678 = vmatprep.subr.mxu0 0.0
    %679 = vmatpush2.msra.mxu0 0.0
    %680 = vmatprep.subr.mxu0 0.0
    %681 = vmatpush2.msra.mxu0 0.0
    %682 = vmatprep.subr.mxu0 0.0
    %683 = vmatpush2.msra.mxu0 0.0
    %684 = vmatprep.mubr.f32.mxu0 0.0
    %685 = vmatmul.mubr.f32.gmra.mxu0 %v619
    %v686 = vpop.f32.mrf.mxu0
    %v687 = vadd.f32 %v189, %v686
    %v688 = vpop.f32.mrf.mxu0
    %689 = vdwg.mxu0
    %v690 = vsel %vm261, %v687, -inf
    %691 = vmax.xlane.f32.xlu0 %v690
    %v692 = vpop.xlane.xlu0 %691
    %v693 = vsub.f32 %v687, %v692
    %v694 = vmul.f32 %v693, 1.442695
    %v695 = vpow.pop %v694
    %v696 = vsel %vm261, %v695, 0.0
    %697 = vadd.xlane.f32.xlu0 %v696
    %v698 = vpop.xlane.xlu0 %697
    %v699 = vlog2.pop %v698
    %v700 = vmul.f32 %v699, 0.6931472
    %v701 = vsub.f32 %v693, %v700
    %v702 = vmul.f32 %v701, 1.442695
    %v703 = vpow.pop %v702
    %v704 = vsub.f32 %v703, %v45
    %v705 = vmul.f32 %v704, 0.5
    %v707 = vsel %vm278, %v705, 0
    %709 = vmatprep.subr.mxu0 0.0
    %710 = vmatpush1.xpose.msra.mxu0 %v328
    %711 = vmatprep.subr.mxu0 0.0
    %712 = vmatpush1.xpose.msra.mxu0 %v325
    %713 = vmatprep.subr.mxu0 0.0
    %714 = vmatpush1.xpose.msra.mxu0 %v322
    %715 = vmatprep.subr.mxu0 0.0
    %716 = vmatpush1.xpose.msra.mxu0 %v319
    %717 = vmatprep.subr.mxu0 0.0
    %718 = vmatpush1.xpose.msra.mxu0 %v316
    %719 = vmatprep.subr.mxu0 0.0
    %720 = vmatpush1.xpose.msra.mxu0 %v313
    %721 = vmatprep.subr.mxu0 0.0
    %722 = vmatpush1.xpose.msra.mxu0 %v310
    %723 = vmatprep.subr.mxu0 0.0
    %724 = vmatpush1.xpose.msra.mxu0 %v307
    %725 = vmatprep.subr.mxu0 0.0
    %726 = vmatpush1.xpose.msra.mxu0 %v304
    %727 = vmatprep.subr.mxu0 0.0
    %728 = vmatpush1.xpose.msra.mxu0 %v301
    %729 = vmatprep.subr.mxu0 0.0
    %730 = vmatpush1.xpose.msra.mxu0 %v298
    %731 = vmatprep.subr.mxu0 0.0
    %732 = vmatpush1.xpose.msra.mxu0 %v295
    %733 = vmatprep.subr.mxu0 0.0
    %734 = vmatpush1.xpose.msra.mxu0 %v292
    %735 = vmatprep.subr.mxu0 0.0
    %736 = vmatpush1.xpose.msra.mxu0 %v289
    %737 = vmatprep.subr.mxu0 0.0
    %738 = vmatpush1.xpose.msra.mxu0 %v286
    %739 = vmatprep.subr.mxu0 0.0
    %740 = vmatpush1.xpose.msra.mxu0 %v283
    %741 = vmatprep.subr.mxu0 0.0
    %742 = vmatpush2.xpose.msra.mxu0 0.0
    %743 = vmatprep.subr.mxu0 0.0
    %744 = vmatpush2.xpose.msra.mxu0 0.0
    %745 = vmatprep.subr.mxu0 0.0
    %746 = vmatpush2.xpose.msra.mxu0 0.0
    %747 = vmatprep.subr.mxu0 0.0
    %748 = vmatpush2.xpose.msra.mxu0 0.0
    %749 = vmatprep.subr.mxu0 0.0
    %750 = vmatpush2.xpose.msra.mxu0 0.0
    %751 = vmatprep.subr.mxu0 0.0
    %752 = vmatpush2.xpose.msra.mxu0 0.0
    %753 = vmatprep.subr.mxu0 0.0
    %754 = vmatpush2.xpose.msra.mxu0 0.0
    %755 = vmatprep.subr.mxu0 0.0
    %756 = vmatpush2.xpose.msra.mxu0 0.0
    %757 = vmatprep.subr.mxu0 0.0
    %758 = vmatpush2.xpose.msra.mxu0 0.0
    %759 = vmatprep.subr.mxu0 0.0
    %760 = vmatpush2.xpose.msra.mxu0 0.0
    %761 = vmatprep.subr.mxu0 0.0
    %762 = vmatpush2.xpose.msra.mxu0 0.0
    %763 = vmatprep.subr.mxu0 0.0
    %764 = vmatpush2.xpose.msra.mxu0 0.0
    %765 = vmatprep.subr.mxu0 0.0
    %766 = vmatpush2.xpose.msra.mxu0 0.0
    %767 = vmatprep.subr.mxu0 0.0
    %768 = vmatpush2.xpose.msra.mxu0 0.0
    %769 = vmatprep.subr.mxu0 0.0
    %770 = vmatpush2.xpose.msra.mxu0 0.0
    %771 = vmatprep.subr.mxu0 0.0
    %772 = vmatpush2.xpose.msra.mxu0 0.0
    %773 = vmatprep.mubr.f32.mxu0 0.0
    %774 = vmatmul.mubr.f32.gmra.mxu0 %v707
    %v775 = vpop.f32.mrf.mxu0
    %v776 = vadd.f32 0.0, %v775
    %v777 = vpop.f32.mrf.mxu0
    %778 = vdwg.mxu0
    %v779 = vmul.f32 %v619, %v619
    %v780 = vsub.f32 1.0, %v779
    %v781 = vmul.f32 %v776, %v780
    %782 = vmatprep.subr.mxu0 0.0
    %783 = vmatpush1.xpose.msra.mxu0 %v62
    %784 = vmatprep.subr.mxu0 0.0
    %785 = vmatpush1.xpose.msra.mxu0 %v61
    %786 = vmatprep.subr.mxu0 0.0
    %787 = vmatpush1.xpose.msra.mxu0 %v60
    %788 = vmatprep.subr.mxu0 0.0
    %789 = vmatpush1.xpose.msra.mxu0 %v59
    %790 = vmatprep.subr.mxu0 0.0
    %791 = vmatpush1.xpose.msra.mxu0 %v58
    %792 = vmatprep.subr.mxu0 0.0
    %793 = vmatpush1.xpose.msra.mxu0 %v57
    %794 = vmatprep.subr.mxu0 0.0
    %795 = vmatpush1.xpose.msra.mxu0 %v56
    %796 = vmatprep.subr.mxu0 0.0
    %797 = vmatpush1.xpose.msra.mxu0 %v55
    %798 = vmatprep.subr.mxu0 0.0
    %799 = vmatpush1.xpose.msra.mxu0 %v54
    %800 = vmatprep.subr.mxu0 0.0
    %801 = vmatpush1.xpose.msra.mxu0 %v53
    %802 = vmatprep.subr.mxu0 0.0
    %803 = vmatpush1.xpose.msra.mxu0 %v52
    %804 = vmatprep.subr.mxu0 0.0
    %805 = vmatpush1.xpose.msra.mxu0 %v51
    %806 = vmatprep.subr.mxu0 0.0
    %807 = vmatpush1.xpose.msra.mxu0 %v50
    %808 = vmatprep.subr.mxu0 0.0
    %809 = vmatpush1.xpose.msra.mxu0 %v49
    %810 = vmatprep.subr.mxu0 0.0
    %811 = vmatpush1.xpose.msra.mxu0 %v48
    %812 = vmatprep.subr.mxu0 0.0
    %813 = vmatpush1.xpose.msra.mxu0 %v47
    %814 = vmatprep.subr.mxu0 0.0
    %815 = vmatpush2.xpose.msra.mxu0 0.0
    %816 = vmatprep.subr.mxu0 0.0
    %817 = vmatpush2.xpose.msra.mxu0 0.0
    %818 = vmatprep.subr.mxu0 0.0
    %819 = vmatpush2.xpose.msra.mxu0 0.0
    %820 = vmatprep.subr.mxu0 0.0
    %821 = vmatpush2.xpose.msra.mxu0 0.0
    %822 = vmatprep.subr.mxu0 0.0
    %823 = vmatpush2.xpose.msra.mxu0 0.0
    %824 = vmatprep.subr.mxu0 0.0
    %825 = vmatpush2.xpose.msra.mxu0 0.0
    %826 = vmatprep.subr.mxu0 0.0
    %827 = vmatpush2.xpose.msra.mxu0 0.0
    %828 = vmatprep.subr.mxu0 0.0
    %829 = vmatpush2.xpose.msra.mxu0 0.0
    %830 = vmatprep.subr.mxu0 0.0
    %831 = vmatpush2.xpose.msra.mxu0 0.0
    %832 = vmatprep.subr.mxu0 0.0
    %833 = vmatpush2.xpose.msra.mxu0 0.0
    %834 = vmatprep.subr.mxu0 0.0
    %835 = vmatpush2.xpose.msra.mxu0 0.0
    %836 = vmatprep.subr.mxu0 0.0
    %837 = vmatpush2.xpose.msra.mxu0 0.0
    %838 = vmatprep.subr.mxu0 0.0
    %839 = vmatpush2.xpose.msra.mxu0 0.0
    %840 = vmatprep.subr.mxu0 0.0
    %841 = vmatpush2.xpose.msra.mxu0 0.0
    %842 = vmatprep.subr.mxu0 0.0
    %843 = vmatpush2.xpose.msra.mxu0 0.0
    %844 = vmatprep.subr.mxu0 0.0
    %845 = vmatpush2.xpose.msra.mxu0 0.0
    %846 = vmatprep.mubr.f32.mxu0 0.0
    %847 = vmatmul.mubr.f32.gmra.mxu0 %v781
    %v848 = vpop.f32.mrf.mxu0
    %v849 = vadd.f32 0.0, %v848
    %v850 = vpop.f32.mrf.mxu0
    %851 = vdwg.mxu0
    %v854 = vunpack.c.l.s4 1966171168
    %v855 = vunpack.c.0.s8 %v854
    %v856 = vlaneseq
    %v857 = vshrl.u32 %v856, 7
    %v858 = vsub.s32 %v855, %v857
    %v859 = vrot.slane %v849, %v858
    %v860 = vcombine.high %v859, %v859
    %v862 = vunpack.c.l.s4 1966171168
    %v863 = vunpack.c.0.s8 %v862
    %v864 = vlaneseq
    %v865 = vshrl.u32 %v864, 7
    %v866 = vsub.s32 %v863, %v865
    %v867 = vrot.slane %v859, %v866
    %v869 = vunpack.c.l.s4 1966171168
    %v870 = vunpack.c.0.s8 %v869
    %v871 = vlaneseq
    %v872 = vshrl.u32 %v871, 7
    %v873 = vsub.s32 %v870, %v872
    %v874 = vrot.slane %v860, %v873
    %v877 = vmul.f32 %v867, 0.000125
    %v878 = vmul.f32 %v874, 0.000125
    %v881 = vlaneseq
    %v882 = vshrl.u32 %v881, 7
    %v883 = vsub.s32 0, %v882
    %v884 = vrot.slane %v877, %v883
    %v885 = vlaneseq
    %v886 = vshrl.u32 %v885, 7
    %v887 = vsub.s32 0, %v886
    %v888 = vrot.slane %v878, %v887
    %v891 = vadd.f32 %v528, %v884
    %v892 = vadd.f32 %v529, %v888
    %v893 = vand.u32 2147483647, %v891
    %v894 = vand.u32 2147483647, %v892
    %895 = vmax.xlane.f32.xlu0 %v893
    %v896 = vpop.xlane.xlu0 %895
    %897 = vmax.xlane.f32.xlu0 %v894
    %v898 = vpop.xlane.xlu0 %897
    %v899 = vadd.f32 %v896, 1e-06
    %v900 = vadd.f32 %v898, 1e-06
    %v901 = vrcp.pop %v899
    %v902 = vmul.f32 %v891, %v901
    %v903 = vrcp.pop %v900
    %v904 = vmul.f32 %v892, %v903
    %905 = vst [vmem:[#allocation2] sm:$0xff] %v902
    %906 = vst [vmem:[#allocation2 + $0x8] sm:$0xff] %v904
    %v907 = vld [vmem:[#allocation2] sm:$0xff]
    %v908 = vld [vmem:[#allocation2 + $0x8] sm:$0xff]
    %v909 = vrot.slane %v907, 4
    %v910 = vadd.f32 %v907, %v909
    %v911 = vrot.slane %v910, 2
    %v912 = vadd.f32 %v910, %v911
    %v913 = vrot.slane %v912, 1
    %v914 = vadd.f32 %v912, %v913
    %v915 = vrot.slane %v908, 4
    %v916 = vadd.f32 %v908, %v915
    %v917 = vrot.slane %v916, 2
    %v918 = vadd.f32 %v916, %v917
    %v919 = vrot.slane %v918, 1
    %v920 = vadd.f32 %v918, %v919
    %v921 = vmul.f32 %v914, %v99
    %v922 = vmul.f32 %v920, %v99
    %v925 = vsel %vm104, %v922, %v921
    %v927 = vadd.f32 %v44, %v925
    %928 = vmatprep.subr.mxu0 0.0
    %929 = vmatpush1.msra.mxu0 %v62
    %930 = vmatprep.subr.mxu0 0.0
    %931 = vmatpush1.msra.mxu0 %v61
    %932 = vmatprep.subr.mxu0 0.0
    %933 = vmatpush1.msra.mxu0 %v60
    %934 = vmatprep.subr.mxu0 0.0
    %935 = vmatpush1.msra.mxu0 %v59
    %936 = vmatprep.subr.mxu0 0.0
    %937 = vmatpush1.msra.mxu0 %v58
    %938 = vmatprep.subr.mxu0 0.0
    %939 = vmatpush1.msra.mxu0 %v57
    %940 = vmatprep.subr.mxu0 0.0
    %941 = vmatpush1.msra.mxu0 %v56
    %942 = vmatprep.subr.mxu0 0.0
    %943 = vmatpush1.msra.mxu0 %v55
    %944 = vmatprep.subr.mxu0 0.0
    %945 = vmatpush1.msra.mxu0 %v54
    %946 = vmatprep.subr.mxu0 0.0
    %947 = vmatpush1.msra.mxu0 %v53
    %948 = vmatprep.subr.mxu0 0.0
    %949 = vmatpush1.msra.mxu0 %v52
    %950 = vmatprep.subr.mxu0 0.0
    %951 = vmatpush1.msra.mxu0 %v51
    %952 = vmatprep.subr.mxu0 0.0
    %953 = vmatpush1.msra.mxu0 %v50
    %954 = vmatprep.subr.mxu0 0.0
    %955 = vmatpush1.msra.mxu0 %v49
    %956 = vmatprep.subr.mxu0 0.0
    %957 = vmatpush1.msra.mxu0 %v48
    %958 = vmatprep.subr.mxu0 0.0
    %959 = vmatpush1.msra.mxu0 %v47
    %960 = vmatprep.subr.mxu0 0.0
    %961 = vmatpush2.msra.mxu0 0.0
    %962 = vmatprep.subr.mxu0 0.0
    %963 = vmatpush2.msra.mxu0 0.0
    %964 = vmatprep.subr.mxu0 0.0
    %965 = vmatpush2.msra.mxu0 0.0
    %966 = vmatprep.subr.mxu0 0.0
    %967 = vmatpush2.msra.mxu0 0.0
    %968 = vmatprep.subr.mxu0 0.0
    %969 = vmatpush2.msra.mxu0 0.0
    %970 = vmatprep.subr.mxu0 0.0
    %971 = vmatpush2.msra.mxu0 0.0
    %972 = vmatprep.subr.mxu0 0.0
    %973 = vmatpush2.msra.mxu0 0.0
    %974 = vmatprep.subr.mxu0 0.0
    %975 = vmatpush2.msra.mxu0 0.0
    %976 = vmatprep.subr.mxu0 0.0
    %977 = vmatpush2.msra.mxu0 0.0
    %978 = vmatprep.subr.mxu0 0.0
    %979 = vmatpush2.msra.mxu0 0.0
    %980 = vmatprep.subr.mxu0 0.0
    %981 = vmatpush2.msra.mxu0 0.0
    %982 = vmatprep.subr.mxu0 0.0
    %983 = vmatpush2.msra.mxu0 0.0
    %984 = vmatprep.subr.mxu0 0.0
    %985 = vmatpush2.msra.mxu0 0.0
    %986 = vmatprep.subr.mxu0 0.0
    %987 = vmatpush2.msra.mxu0 0.0
    %988 = vmatprep.subr.mxu0 0.0
    %989 = vmatpush2.msra.mxu0 0.0
    %990 = vmatprep.subr.mxu0 0.0
    %991 = vmatpush2.msra.mxu0 0.0
    %992 = vmatprep.mubr.f32.mxu0 0.0
    %993 = vmatmul.mubr.f32.gmra.mxu0 %v927
    %v994 = vpop.f32.mrf.mxu0
    %v995 = vadd.f32 %v112, %v994
    %v996 = vpop.f32.mrf.mxu0
    %997 = vdwg.mxu0
    %v998 = vtanh.pop %v995
    %999 = vmatprep.subr.mxu0 0.0
    %1000 = vmatpush1.msra.mxu0 %v79
    %1001 = vmatprep.subr.mxu0 0.0
    %1002 = vmatpush1.msra.mxu0 %v78
    %1003 = vmatprep.subr.mxu0 0.0
    %1004 = vmatpush1.msra.mxu0 %v77
    %1005 = vmatprep.subr.mxu0 0.0
    %1006 = vmatpush1.msra.mxu0 %v76
    %1007 = vmatprep.subr.mxu0 0.0
    %1008 = vmatpush1.msra.mxu0 %v75
    %1009 = vmatprep.subr.mxu0 0.0
    %1010 = vmatpush1.msra.mxu0 %v74
    %1011 = vmatprep.subr.mxu0 0.0
    %1012 = vmatpush1.msra.mxu0 %v73
    %1013 = vmatprep.subr.mxu0 0.0
    %1014 = vmatpush1.msra.mxu0 %v72
    %1015 = vmatprep.subr.mxu0 0.0
    %1016 = vmatpush1.msra.mxu0 %v71
    %1017 = vmatprep.subr.mxu0 0.0
    %1018 = vmatpush1.msra.mxu0 %v70
    %1019 = vmatprep.subr.mxu0 0.0
    %1020 = vmatpush1.msra.mxu0 %v69
    %1021 = vmatprep.subr.mxu0 0.0
    %1022 = vmatpush1.msra.mxu0 %v68
    %1023 = vmatprep.subr.mxu0 0.0
    %1024 = vmatpush1.msra.mxu0 %v67
    %1025 = vmatprep.subr.mxu0 0.0
    %1026 = vmatpush1.msra.mxu0 %v66
    %1027 = vmatprep.subr.mxu0 0.0
    %1028 = vmatpush1.msra.mxu0 %v65
    %1029 = vmatprep.subr.mxu0 0.0
    %1030 = vmatpush1.msra.mxu0 %v64
    %1031 = vmatprep.subr.mxu0 0.0
    %1032 = vmatpush2.msra.mxu0 0.0
    %1033 = vmatprep.subr.mxu0 0.0
    %1034 = vmatpush2.msra.mxu0 0.0
    %1035 = vmatprep.subr.mxu0 0.0
    %1036 = vmatpush2.msra.mxu0 0.0
    %1037 = vmatprep.subr.mxu0 0.0
    %1038 = vmatpush2.msra.mxu0 0.0
    %1039 = vmatprep.subr.mxu0 0.0
    %1040 = vmatpush2.msra.mxu0 0.0
    %1041 = vmatprep.subr.mxu0 0.0
    %1042 = vmatpush2.msra.mxu0 0.0
    %1043 = vmatprep.subr.mxu0 0.0
    %1044 = vmatpush2.msra.mxu0 0.0
    %1045 = vmatprep.subr.mxu0 0.0
    %1046 = vmatpush2.msra.mxu0 0.0
    %1047 = vmatprep.subr.mxu0 0.0
    %1048 = vmatpush2.msra.mxu0 0.0
    %1049 = vmatprep.subr.mxu0 0.0
    %1050 = vmatpush2.msra.mxu0 0.0
    %1051 = vmatprep.subr.mxu0 0.0
    %1052 = vmatpush2.msra.mxu0 0.0
    %1053 = vmatprep.subr.mxu0 0.0
    %1054 = vmatpush2.msra.mxu0 0.0
    %1055 = vmatprep.subr.mxu0 0.0
    %1056 = vmatpush2.msra.mxu0 0.0
    %1057 = vmatprep.subr.mxu0 0.0
    %1058 = vmatpush2.msra.mxu0 0.0
    %1059 = vmatprep.subr.mxu0 0.0
    %1060 = vmatpush2.msra.mxu0 0.0
    %1061 = vmatprep.subr.mxu0 0.0
    %1062 = vmatpush2.msra.mxu0 0.0
    %1063 = vmatprep.mubr.f32.mxu0 0.0
    %1064 = vmatmul.mubr.f32.gmra.mxu0 %v998
    %v1065 = vpop.f32.mrf.mxu0
    %v1066 = vadd.f32 %v189, %v1065
    %v1067 = vpop.f32.mrf.mxu0
    %1068 = vdwg.mxu0
    %v1069 = vsel %vm261, %v1066, -inf
    %1070 = vmax.xlane.f32.xlu0 %v1069
    %v1071 = vpop.xlane.xlu0 %1070
    %v1072 = vsub.f32 %v1066, %v1071
    %v1073 = vmul.f32 %v1072, 1.442695
    %v1074 = vpow.pop %v1073
    %v1075 = vsel %vm261, %v1074, 0.0
    %1076 = vadd.xlane.f32.xlu0 %v1075
    %v1077 = vpop.xlane.xlu0 %1076
    %v1078 = vlog2.pop %v1077
    %v1079 = vmul.f32 %v1078, 0.6931472
    %v1080 = vsub.f32 %v1072, %v1079
    %v1081 = vmul.f32 %v1080, 1.442695
    %v1082 = vpow.pop %v1081
    %v1083 = vsub.f32 %v1082, %v45
    %v1084 = vmul.f32 %v1083, 0.5
    %v1086 = vsel %vm278, %v1084, 0
    %1088 = vmatprep.subr.mxu0 0.0
    %1089 = vmatpush1.xpose.msra.mxu0 %v328
    %1090 = vmatprep.subr.mxu0 0.0
    %1091 = vmatpush1.xpose.msra.mxu0 %v325
    %1092 = vmatprep.subr.mxu0 0.0
    %1093 = vmatpush1.xpose.msra.mxu0 %v322
    %1094 = vmatprep.subr.mxu0 0.0
    %1095 = vmatpush1.xpose.msra.mxu0 %v319
    %1096 = vmatprep.subr.mxu0 0.0
    %1097 = vmatpush1.xpose.msra.mxu0 %v316
    %1098 = vmatprep.subr.mxu0 0.0
    %1099 = vmatpush1.xpose.msra.mxu0 %v313
    %1100 = vmatprep.subr.mxu0 0.0
    %1101 = vmatpush1.xpose.msra.mxu0 %v310
    %1102 = vmatprep.subr.mxu0 0.0
    %1103 = vmatpush1.xpose.msra.mxu0 %v307
    %1104 = vmatprep.subr.mxu0 0.0
    %1105 = vmatpush1.xpose.msra.mxu0 %v304
    %1106 = vmatprep.subr.mxu0 0.0
    %1107 = vmatpush1.xpose.msra.mxu0 %v301
    %1108 = vmatprep.subr.mxu0 0.0
    %1109 = vmatpush1.xpose.msra.mxu0 %v298
    %1110 = vmatprep.subr.mxu0 0.0
    %1111 = vmatpush1.xpose.msra.mxu0 %v295
    %1112 = vmatprep.subr.mxu0 0.0
    %1113 = vmatpush1.xpose.msra.mxu0 %v292
    %1114 = vmatprep.subr.mxu0 0.0
    %1115 = vmatpush1.xpose.msra.mxu0 %v289
    %1116 = vmatprep.subr.mxu0 0.0
    %1117 = vmatpush1.xpose.msra.mxu0 %v286
    %1118 = vmatprep.subr.mxu0 0.0
    %1119 = vmatpush1.xpose.msra.mxu0 %v283
    %1120 = vmatprep.subr.mxu0 0.0
    %1121 = vmatpush2.xpose.msra.mxu0 0.0
    %1122 = vmatprep.subr.mxu0 0.0
    %1123 = vmatpush2.xpose.msra.mxu0 0.0
    %1124 = vmatprep.subr.mxu0 0.0
    %1125 = vmatpush2.xpose.msra.mxu0 0.0
    %1126 = vmatprep.subr.mxu0 0.0
    %1127 = vmatpush2.xpose.msra.mxu0 0.0
    %1128 = vmatprep.subr.mxu0 0.0
    %1129 = vmatpush2.xpose.msra.mxu0 0.0
    %1130 = vmatprep.subr.mxu0 0.0
    %1131 = vmatpush2.xpose.msra.mxu0 0.0
    %1132 = vmatprep.subr.mxu0 0.0
    %1133 = vmatpush2.xpose.msra.mxu0 0.0
    %1134 = vmatprep.subr.mxu0 0.0
    %1135 = vmatpush2.xpose.msra.mxu0 0.0
    %1136 = vmatprep.subr.mxu0 0.0
    %1137 = vmatpush2.xpose.msra.mxu0 0.0
    %1138 = vmatprep.subr.mxu0 0.0
    %1139 = vmatpush2.xpose.msra.mxu0 0.0
    %1140 = vmatprep.subr.mxu0 0.0
    %1141 = vmatpush2.xpose.msra.mxu0 0.0
    %1142 = vmatprep.subr.mxu0 0.0
    %1143 = vmatpush2.xpose.msra.mxu0 0.0
    %1144 = vmatprep.subr.mxu0 0.0
    %1145 = vmatpush2.xpose.msra.mxu0 0.0
    %1146 = vmatprep.subr.mxu0 0.0
    %1147 = vmatpush2.xpose.msra.mxu0 0.0
    %1148 = vmatprep.subr.mxu0 0.0
    %1149 = vmatpush2.xpose.msra.mxu0 0.0
    %1150 = vmatprep.subr.mxu0 0.0
    %1151 = vmatpush2.xpose.msra.mxu0 0.0
    %1152 = vmatprep.mubr.f32.mxu0 0.0
    %1153 = vmatmul.mubr.f32.gmra.mxu0 %v1086
    %v1154 = vpop.f32.mrf.mxu0
    %v1155 = vadd.f32 0.0, %v1154
    %v1156 = vpop.f32.mrf.mxu0
    %1157 = vdwg.mxu0
    %v1158 = vmul.f32 %v998, %v998
    %v1159 = vsub.f32 1.0, %v1158
    %v1160 = vmul.f32 %v1155, %v1159
    %1161 = vmatprep.subr.mxu0 0.0
    %1162 = vmatpush1.xpose.msra.mxu0 %v62
    %1163 = vmatprep.subr.mxu0 0.0
    %1164 = vmatpush1.xpose.msra.mxu0 %v61
    %1165 = vmatprep.subr.mxu0 0.0
    %1166 = vmatpush1.xpose.msra.mxu0 %v60
    %1167 = vmatprep.subr.mxu0 0.0
    %1168 = vmatpush1.xpose.msra.mxu0 %v59
    %1169 = vmatprep.subr.mxu0 0.0
    %1170 = vmatpush1.xpose.msra.mxu0 %v58
    %1171 = vmatprep.subr.mxu0 0.0
    %1172 = vmatpush1.xpose.msra.mxu0 %v57
    %1173 = vmatprep.subr.mxu0 0.0
    %1174 = vmatpush1.xpose.msra.mxu0 %v56
    %1175 = vmatprep.subr.mxu0 0.0
    %1176 = vmatpush1.xpose.msra.mxu0 %v55
    %1177 = vmatprep.subr.mxu0 0.0
    %1178 = vmatpush1.xpose.msra.mxu0 %v54
    %1179 = vmatprep.subr.mxu0 0.0
    %1180 = vmatpush1.xpose.msra.mxu0 %v53
    %1181 = vmatprep.subr.mxu0 0.0
    %1182 = vmatpush1.xpose.msra.mxu0 %v52
    %1183 = vmatprep.subr.mxu0 0.0
    %1184 = vmatpush1.xpose.msra.mxu0 %v51
    %1185 = vmatprep.subr.mxu0 0.0
    %1186 = vmatpush1.xpose.msra.mxu0 %v50
    %1187 = vmatprep.subr.mxu0 0.0
    %1188 = vmatpush1.xpose.msra.mxu0 %v49
    %1189 = vmatprep.subr.mxu0 0.0
    %1190 = vmatpush1.xpose.msra.mxu0 %v48
    %1191 = vmatprep.subr.mxu0 0.0
    %1192 = vmatpush1.xpose.msra.mxu0 %v47
    %1193 = vmatprep.subr.mxu0 0.0
    %1194 = vmatpush2.xpose.msra.mxu0 0.0
    %1195 = vmatprep.subr.mxu0 0.0
    %1196 = vmatpush2.xpose.msra.mxu0 0.0
    %1197 = vmatprep.subr.mxu0 0.0
    %1198 = vmatpush2.xpose.msra.mxu0 0.0
    %1199 = vmatprep.subr.mxu0 0.0
    %1200 = vmatpush2.xpose.msra.mxu0 0.0
    %1201 = vmatprep.subr.mxu0 0.0
    %1202 = vmatpush2.xpose.msra.mxu0 0.0
    %1203 = vmatprep.subr.mxu0 0.0
    %1204 = vmatpush2.xpose.msra.mxu0 0.0
    %1205 = vmatprep.subr.mxu0 0.0
    %1206 = vmatpush2.xpose.msra.mxu0 0.0
    %1207 = vmatprep.subr.mxu0 0.0
    %1208 = vmatpush2.xpose.msra.mxu0 0.0
    %1209 = vmatprep.subr.mxu0 0.0
    %1210 = vmatpush2.xpose.msra.mxu0 0.0
    %1211 = vmatprep.subr.mxu0 0.0
    %1212 = vmatpush2.xpose.msra.mxu0 0.0
    %1213 = vmatprep.subr.mxu0 0.0
    %1214 = vmatpush2.xpose.msra.mxu0 0.0
    %1215 = vmatprep.subr.mxu0 0.0
    %1216 = vmatpush2.xpose.msra.mxu0 0.0
    %1217 = vmatprep.subr.mxu0 0.0
    %1218 = vmatpush2.xpose.msra.mxu0 0.0
    %1219 = vmatprep.subr.mxu0 0.0
    %1220 = vmatpush2.xpose.msra.mxu0 0.0
    %1221 = vmatprep.subr.mxu0 0.0
    %1222 = vmatpush2.xpose.msra.mxu0 0.0
    %1223 = vmatprep.subr.mxu0 0.0
    %1224 = vmatpush2.xpose.msra.mxu0 0.0
    %1225 = vmatprep.mubr.f32.mxu0 0.0
    %1226 = vmatmul.mubr.f32.gmra.mxu0 %v1160
    %v1227 = vpop.f32.mrf.mxu0
    %v1228 = vadd.f32 0.0, %v1227
    %v1229 = vpop.f32.mrf.mxu0
    %1230 = vdwg.mxu0
    %v1233 = vunpack.c.l.s4 1966171168
    %v1234 = vunpack.c.0.s8 %v1233
    %v1235 = vlaneseq
    %v1236 = vshrl.u32 %v1235, 7
    %v1237 = vsub.s32 %v1234, %v1236
    %v1238 = vrot.slane %v1228, %v1237
    %v1239 = vcombine.high %v1238, %v1238
    %v1241 = vunpack.c.l.s4 1966171168
    %v1242 = vunpack.c.0.s8 %v1241
    %v1243 = vlaneseq
    %v1244 = vshrl.u32 %v1243, 7
    %v1245 = vsub.s32 %v1242, %v1244
    %v1246 = vrot.slane %v1238, %v1245
    %v1248 = vunpack.c.l.s4 1966171168
    %v1249 = vunpack.c.0.s8 %v1248
    %v1250 = vlaneseq
    %v1251 = vshrl.u32 %v1250, 7
    %v1252 = vsub.s32 %v1249, %v1251
    %v1253 = vrot.slane %v1239, %v1252
    %v1256 = vmul.f32 %v1246, 0.000125
    %v1257 = vmul.f32 %v1253, 0.000125
    %v1260 = vlaneseq
    %v1261 = vshrl.u32 %v1260, 7
    %v1262 = vsub.s32 0, %v1261
    %v1263 = vrot.slane %v1256, %v1262
    %v1264 = vlaneseq
    %v1265 = vshrl.u32 %v1264, 7
    %v1266 = vsub.s32 0, %v1265
    %v1267 = vrot.slane %v1257, %v1266
    %v1270 = vadd.f32 %v907, %v1263
    %v1271 = vadd.f32 %v908, %v1267
    %v1272 = vand.u32 2147483647, %v1270
    %v1273 = vand.u32 2147483647, %v1271
    %1274 = vmax.xlane.f32.xlu0 %v1272
    %v1275 = vpop.xlane.xlu0 %1274
    %1276 = vmax.xlane.f32.xlu0 %v1273
    %v1277 = vpop.xlane.xlu0 %1276
    %v1278 = vadd.f32 %v1275, 1e-06
    %v1279 = vadd.f32 %v1277, 1e-06
    %v1280 = vrcp.pop %v1278
    %v1281 = vmul.f32 %v1270, %v1280
    %v1282 = vrcp.pop %v1279
    %v1283 = vmul.f32 %v1271, %v1282
    %1284 = vst [vmem:[#allocation2] sm:$0xff] %v1281
    %1285 = vst [vmem:[#allocation2 + $0x8] sm:$0xff] %v1283
    %v1286 = vld [vmem:[#allocation2] sm:$0xff]
    %v1287 = vld [vmem:[#allocation2 + $0x8] sm:$0xff]
    %v1288 = vrot.slane %v1286, 4
    %v1289 = vadd.f32 %v1286, %v1288
    %v1290 = vrot.slane %v1289, 2
    %v1291 = vadd.f32 %v1289, %v1290
    %v1292 = vrot.slane %v1291, 1
    %v1293 = vadd.f32 %v1291, %v1292
    %v1294 = vrot.slane %v1287, 4
    %v1295 = vadd.f32 %v1287, %v1294
    %v1296 = vrot.slane %v1295, 2
    %v1297 = vadd.f32 %v1295, %v1296
    %v1298 = vrot.slane %v1297, 1
    %v1299 = vadd.f32 %v1297, %v1298
    %v1300 = vmul.f32 %v1293, %v99
    %v1301 = vmul.f32 %v1299, %v99
    %v1304 = vsel %vm104, %v1301, %v1300
    %v1306 = vadd.f32 %v44, %v1304
    %1307 = vmatprep.subr.mxu0 0.0
    %1308 = vmatpush1.msra.mxu0 %v62
    %1309 = vmatprep.subr.mxu0 0.0
    %1310 = vmatpush1.msra.mxu0 %v61
    %1311 = vmatprep.subr.mxu0 0.0
    %1312 = vmatpush1.msra.mxu0 %v60
    %1313 = vmatprep.subr.mxu0 0.0
    %1314 = vmatpush1.msra.mxu0 %v59
    %1315 = vmatprep.subr.mxu0 0.0
    %1316 = vmatpush1.msra.mxu0 %v58
    %1317 = vmatprep.subr.mxu0 0.0
    %1318 = vmatpush1.msra.mxu0 %v57
    %1319 = vmatprep.subr.mxu0 0.0
    %1320 = vmatpush1.msra.mxu0 %v56
    %1321 = vmatprep.subr.mxu0 0.0
    %1322 = vmatpush1.msra.mxu0 %v55
    %1323 = vmatprep.subr.mxu0 0.0
    %1324 = vmatpush1.msra.mxu0 %v54
    %1325 = vmatprep.subr.mxu0 0.0
    %1326 = vmatpush1.msra.mxu0 %v53
    %1327 = vmatprep.subr.mxu0 0.0
    %1328 = vmatpush1.msra.mxu0 %v52
    %1329 = vmatprep.subr.mxu0 0.0
    %1330 = vmatpush1.msra.mxu0 %v51
    %1331 = vmatprep.subr.mxu0 0.0
    %1332 = vmatpush1.msra.mxu0 %v50
    %1333 = vmatprep.subr.mxu0 0.0
    %1334 = vmatpush1.msra.mxu0 %v49
    %1335 = vmatprep.subr.mxu0 0.0
    %1336 = vmatpush1.msra.mxu0 %v48
    %1337 = vmatprep.subr.mxu0 0.0
    %1338 = vmatpush1.msra.mxu0 %v47
    %1339 = vmatprep.subr.mxu0 0.0
    %1340 = vmatpush2.msra.mxu0 0.0
    %1341 = vmatprep.subr.mxu0 0.0
    %1342 = vmatpush2.msra.mxu0 0.0
    %1343 = vmatprep.subr.mxu0 0.0
    %1344 = vmatpush2.msra.mxu0 0.0
    %1345 = vmatprep.subr.mxu0 0.0
    %1346 = vmatpush2.msra.mxu0 0.0
    %1347 = vmatprep.subr.mxu0 0.0
    %1348 = vmatpush2.msra.mxu0 0.0
    %1349 = vmatprep.subr.mxu0 0.0
    %1350 = vmatpush2.msra.mxu0 0.0
    %1351 = vmatprep.subr.mxu0 0.0
    %1352 = vmatpush2.msra.mxu0 0.0
    %1353 = vmatprep.subr.mxu0 0.0
    %1354 = vmatpush2.msra.mxu0 0.0
    %1355 = vmatprep.subr.mxu0 0.0
    %1356 = vmatpush2.msra.mxu0 0.0
    %1357 = vmatprep.subr.mxu0 0.0
    %1358 = vmatpush2.msra.mxu0 0.0
    %1359 = vmatprep.subr.mxu0 0.0
    %1360 = vmatpush2.msra.mxu0 0.0
    %1361 = vmatprep.subr.mxu0 0.0
    %1362 = vmatpush2.msra.mxu0 0.0
    %1363 = vmatprep.subr.mxu0 0.0
    %1364 = vmatpush2.msra.mxu0 0.0
    %1365 = vmatprep.subr.mxu0 0.0
    %1366 = vmatpush2.msra.mxu0 0.0
    %1367 = vmatprep.subr.mxu0 0.0
    %1368 = vmatpush2.msra.mxu0 0.0
    %1369 = vmatprep.subr.mxu0 0.0
    %1370 = vmatpush2.msra.mxu0 0.0
    %1371 = vmatprep.mubr.f32.mxu0 0.0
    %1372 = vmatmul.mubr.f32.gmra.mxu0 %v1306
    %v1373 = vpop.f32.mrf.mxu0
    %v1374 = vadd.f32 %v112, %v1373
    %v1375 = vpop.f32.mrf.mxu0
    %1376 = vdwg.mxu0
    %v1377 = vtanh.pop %v1374
    %1378 = vmatprep.subr.mxu0 0.0
    %1379 = vmatpush1.msra.mxu0 %v79
    %1380 = vmatprep.subr.mxu0 0.0
    %1381 = vmatpush1.msra.mxu0 %v78
    %1382 = vmatprep.subr.mxu0 0.0
    %1383 = vmatpush1.msra.mxu0 %v77
    %1384 = vmatprep.subr.mxu0 0.0
    %1385 = vmatpush1.msra.mxu0 %v76
    %1386 = vmatprep.subr.mxu0 0.0
    %1387 = vmatpush1.msra.mxu0 %v75
    %1388 = vmatprep.subr.mxu0 0.0
    %1389 = vmatpush1.msra.mxu0 %v74
    %1390 = vmatprep.subr.mxu0 0.0
    %1391 = vmatpush1.msra.mxu0 %v73
    %1392 = vmatprep.subr.mxu0 0.0
    %1393 = vmatpush1.msra.mxu0 %v72
    %1394 = vmatprep.subr.mxu0 0.0
    %1395 = vmatpush1.msra.mxu0 %v71
    %1396 = vmatprep.subr.mxu0 0.0
    %1397 = vmatpush1.msra.mxu0 %v70
    %1398 = vmatprep.subr.mxu0 0.0
    %1399 = vmatpush1.msra.mxu0 %v69
    %1400 = vmatprep.subr.mxu0 0.0
    %1401 = vmatpush1.msra.mxu0 %v68
    %1402 = vmatprep.subr.mxu0 0.0
    %1403 = vmatpush1.msra.mxu0 %v67
    %1404 = vmatprep.subr.mxu0 0.0
    %1405 = vmatpush1.msra.mxu0 %v66
    %1406 = vmatprep.subr.mxu0 0.0
    %1407 = vmatpush1.msra.mxu0 %v65
    %1408 = vmatprep.subr.mxu0 0.0
    %1409 = vmatpush1.msra.mxu0 %v64
    %1410 = vmatprep.subr.mxu0 0.0
    %1411 = vmatpush2.msra.mxu0 0.0
    %1412 = vmatprep.subr.mxu0 0.0
    %1413 = vmatpush2.msra.mxu0 0.0
    %1414 = vmatprep.subr.mxu0 0.0
    %1415 = vmatpush2.msra.mxu0 0.0
    %1416 = vmatprep.subr.mxu0 0.0
    %1417 = vmatpush2.msra.mxu0 0.0
    %1418 = vmatprep.subr.mxu0 0.0
    %1419 = vmatpush2.msra.mxu0 0.0
    %1420 = vmatprep.subr.mxu0 0.0
    %1421 = vmatpush2.msra.mxu0 0.0
    %1422 = vmatprep.subr.mxu0 0.0
    %1423 = vmatpush2.msra.mxu0 0.0
    %1424 = vmatprep.subr.mxu0 0.0
    %1425 = vmatpush2.msra.mxu0 0.0
    %1426 = vmatprep.subr.mxu0 0.0
    %1427 = vmatpush2.msra.mxu0 0.0
    %1428 = vmatprep.subr.mxu0 0.0
    %1429 = vmatpush2.msra.mxu0 0.0
    %1430 = vmatprep.subr.mxu0 0.0
    %1431 = vmatpush2.msra.mxu0 0.0
    %1432 = vmatprep.subr.mxu0 0.0
    %1433 = vmatpush2.msra.mxu0 0.0
    %1434 = vmatprep.subr.mxu0 0.0
    %1435 = vmatpush2.msra.mxu0 0.0
    %1436 = vmatprep.subr.mxu0 0.0
    %1437 = vmatpush2.msra.mxu0 0.0
    %1438 = vmatprep.subr.mxu0 0.0
    %1439 = vmatpush2.msra.mxu0 0.0
    %1440 = vmatprep.subr.mxu0 0.0
    %1441 = vmatpush2.msra.mxu0 0.0
    %1442 = vmatprep.mubr.f32.mxu0 0.0
    %1443 = vmatmul.mubr.f32.gmra.mxu0 %v1377
    %v1444 = vpop.f32.mrf.mxu0
    %v1445 = vadd.f32 %v189, %v1444
    %v1446 = vpop.f32.mrf.mxu0
    %1447 = vdwg.mxu0
    %v1448 = vsel %vm261, %v1445, -inf
    %1449 = vmax.xlane.f32.xlu0 %v1448
    %v1450 = vpop.xlane.xlu0 %1449
    %v1451 = vsub.f32 %v1445, %v1450
    %v1452 = vmul.f32 %v1451, 1.442695
    %v1453 = vpow.pop %v1452
    %v1454 = vsel %vm261, %v1453, 0.0
    %1455 = vadd.xlane.f32.xlu0 %v1454
    %v1456 = vpop.xlane.xlu0 %1455
    %v1457 = vlog2.pop %v1456
    %v1458 = vmul.f32 %v1457, 0.6931472
    %v1459 = vsub.f32 %v1451, %v1458
    %v1460 = vmul.f32 %v1459, 1.442695
    %v1461 = vpow.pop %v1460
    %v1462 = vsub.f32 %v46, %v1459
    %v1463 = vmul.f32 %v45, %v1462
    %v1464 = vsub.f32 %v1459, %v46
    %v1465 = vmul.f32 %v1461, %v1464
    %v1466 = vadd.f32 %v1463, %v1465
    %v1467 = vsel %vm261, %v1466, 0.0
    %1468 = vadd.xlane.f32.xlu0 %v1467
    %v1469 = vpop.xlane.xlu0 %1468
    %v1470 = vrot.slane %v1469, 4
    %v1471 = vadd.f32 %v1469, %v1470
    %v1472 = vrot.slane %v1471, 2
    %v1473 = vadd.f32 %v1471, %v1472
    %v1474 = vrot.slane %v1473, 1
    %v1475 = vadd.f32 %v1473, %v1474
    %s1476 = vtos %v1475
    %v1477 = vstv %s1476
    %v1478 = vmul.f32 %v1477, 0.5
    %vm1479 = vcmask 0
    %1480 = vst.msk [vmem:[#allocation6] sm:$0x1] %vm1479, %v1478
    // Predicated region
    $region38: #{tpu_custom_call.1} parent=1 // pred_check
      _
    $region39: #{tpu_custom_call.1} parent=1 // pred_check_branch
      %1482 = sbr.rel (0) target = $region41
    $region40: #{tpu_custom_call.1} parent=1 // pred_region
      %s1484 = ssub.s32 16, 16
      %1485 = vsyncadd [#allocation5], %s1484
      %s1487 = sshll.u32 [#allocation6], 4
      %s1488 = int_to_ptr.vmem [resolvable:$true] %s1487
      %1490 = dma.vmem_to_hbm [thread:$0]  %s1488, 16, %s8, [#allocation5]
    $region41: #{tpu_custom_call.1} parent=1 // pred_fallthru
      _
    // Predicated region
    $region42: #{tpu_custom_call.1} parent=1 // pred_check
      _
    $region43: #{tpu_custom_call.1} parent=1 // pred_check_branch
      %1492 = sbr.rel (0) target = $region45
    $region44: #{tpu_custom_call.1} parent=1 // pred_region
      %1493 = dma.done [#allocation5], 16
    $region45: #{tpu_custom_call.1} parent=1 // pred_fallthru
      _
    %1494 = vsyncpa [#allocation4], 1
    %1495 = vsyncpa [#allocation5], 1

</llo_original>
